<compile_context>
chip_gen: v5e
topology: v5e:2x2
jax: 0.10.0
libtpu: 0.0.40
codegen_flags: <defaults>
</compile_context>

<pallas_src>
import functools

import jax
import jax.numpy as jnp
from jax import lax
from jax.experimental import pallas as pl
from jax.experimental.pallas import tpu as pltpu

EPS = 1e-5  # nn.BatchNorm3d default eps


def _round_up(a, m):
    return -(-a // m) * m


def _fused_block_kernel(x_ref, wa_ref, ba_ref, wb_ref, bb_ref, o_ref, z_ref, *, stride):
    """Fused [conv1+BN1+ReLU || downsample] -> [conv2+BN2 + residual + ReLU].

    x_ref : (T, S_blk, Cin)        bf16 input slab (batch dim squeezed by BlockSpec)
    wa_ref: (3, Cin, 2C)  ba_ref: (1, 2C)   -- stage-1 folded weights / bias
    wb_ref: (3, 2C, C)    bb_ref: (1, C)    -- stage-2 folded weights / bias (+ identity rows)
    o_ref : (T1, S_blk, C)         final output slab
    z_ref : (T1, S_blk, 2C)        VMEM scratch holding [y1 | d]
    """
    t_in, s_blk, _ = x_ref.shape
    t_mid = z_ref.shape[0]
    c_tot = z_ref.shape[-1]
    c_out = o_ref.shape[-1]

    # Hoist weight / bias loads out of the time loops (values stay in vregs; JAX does not CSE
    # broadcasts, so build the ReLU mask exactly once here as well).
    wa = [wa_ref[0], wa_ref[1], wa_ref[2]]
    wb = [wb_ref[0], wb_ref[1], wb_ref[2]]
    ba = ba_ref[...].astype(jnp.float32)            # (1, 2C)
    bb = bb_ref[...].astype(jnp.float32)            # (1, C)
    # ReLU applies only to the y1 half of z; the downsample half passes through untouched.
    keep = lax.broadcasted_iota(jnp.int32, (s_blk, c_tot), 1) < c_out

    # ---- stage 1: temporal 3-tap conv with stride; taps outside [0, T) are the zero pad ----
    for t in range(t_mid):
        acc = ba
        for k in range(3):
            ti = t * stride + k - 1                 # static -> OOB taps simply skipped
            if 0 <= ti < t_in:
                acc = acc + jnp.dot(x_ref[ti], wa[k],
                                    preferred_element_type=jnp.float32)
        z_ref[t] = jnp.where(keep, jnp.maximum(acc, 0.0), acc).astype(z_ref.dtype)

    # ---- stage 2: stride-1 temporal conv over z (+ residual via identity rows) + ReLU ----
    for t in range(t_mid):
        acc = bb
        for k in range(3):
            ti = t + k - 1
            if 0 <= ti < t_mid:
                acc = acc + jnp.dot(z_ref[ti], wb[k],
                                    preferred_element_type=jnp.float32)
        o_ref[t] = jnp.maximum(acc, 0.0).astype(o_ref.dtype)


def temporal_conv3d_block(x, wa, ba, wb, bb, *, stride, out_dtype=jnp.float32):
    """x: (N, T, S, Cin) bf16 -> (N, T1, S, C) out_dtype, whole residual block fused."""
    N, T, S, Cin = x.shape
    c_tot = wa.shape[-1]
    c_out = c_tot // 2
    T1 = (T - 1) // stride + 1                      # temporal stride, pad=1, k=3

    # Spatial tile: multiple of 8 sublane rows, sized so live buffers (double-buffered in/out
    # blocks + z scratch + weights) stay well under the scoped VMEM limit (v7x: 64 MiB phys).
    in_b = jnp.dtype(x.dtype).itemsize
    out_b = jnp.dtype(out_dtype).itemsize
    per_row = (2 * T * Cin * in_b                   # input block, double-buffered
               + 2 * T1 * c_out * out_b             # output block, double-buffered
               + T1 * c_tot * 2)                    # bf16 z scratch, single
    budget = 20 * 1024 * 1024
    max_rows = max(8, (budget // max(per_row, 1)) // 8 * 8)
    s_pad8 = _round_up(S, 8)
    s_blk = s_pad8 if s_pad8 <= max_rows else max_rows
    s_total = _round_up(S, s_blk)
    if s_total != S:                                # pad spatial rows (independent -> sliced off)
        x = jnp.pad(x, ((0, 0), (0, 0), (0, s_total - S), (0, 0)))

    # Advisory cost for the XLA scheduler (2*K*N flops per matmul row, both stages).
    flops = 2 * N * T1 * s_total * 3 * (Cin * c_tot + c_tot * c_out)
    bytes_accessed = (N * T * s_total * Cin * in_b
                      + N * T1 * s_total * c_out * out_b
                      + 3 * (Cin * c_tot + c_tot * c_out) * 2
                      + (c_tot + c_out) * 4)

    kern = functools.partial(_fused_block_kernel, stride=stride)
    out = pl.pallas_call(
        kern,
        out_shape=jax.ShapeDtypeStruct((N, T1, s_total, c_out), out_dtype),
        grid_spec=pltpu.PrefetchScalarGridSpec(
            num_scalar_prefetch=0,
            grid=(N, s_total // s_blk),
            in_specs=[
                pl.BlockSpec((None, T, s_blk, Cin), lambda n, si: (n, 0, si, 0)),
                # grid-invariant index maps -> weights/biases DMA'd once and kept in VMEM
                pl.BlockSpec((3, Cin, c_tot), lambda n, si: (0, 0, 0)),
                pl.BlockSpec((1, c_tot), lambda n, si: (0, 0)),
                pl.BlockSpec((3, c_tot, c_out), lambda n, si: (0, 0, 0)),
                pl.BlockSpec((1, c_out), lambda n, si: (0, 0)),
            ],
            out_specs=pl.BlockSpec((None, T1, s_blk, c_out),
                                   lambda n, si: (n, 0, si, 0)),
            scratch_shapes=[pltpu.VMEM((T1, s_blk, c_tot), jnp.bfloat16)]),
        compiler_params=pltpu.CompilerParams(
            dimension_semantics=("parallel", "parallel"),
            vmem_limit_bytes=32 * 1024 * 1024),
        cost_estimate=pl.CostEstimate(flops=int(flops), transcendentals=0,
                                      bytes_accessed=int(bytes_accessed)),
    )(x, wa, jnp.asarray(ba, jnp.float32).reshape(1, c_tot),
      wb, jnp.asarray(bb, jnp.float32).reshape(1, c_out))
    if s_total != S:
        out = out[:, :, :S, :]
    return out


def temporal_conv3d_forward(x, p, stride):
    """Full TemporalConv3D.forward.  x: (N, C_in, T, H, W) -> (N, C_out, T', H', W')."""
    # TODO(synk): BatchNorm3d is implemented in eval/inference mode with fixed running stats
    # (training-mode batch statistics not implemented).
    N, Cin, T, H, W = x.shape
    Cout = p['w1'].shape[-1]

    # Fold eval-mode BN + conv bias into weights (host-side precompute, f32).
    s1 = p['g1'] * lax.rsqrt(p['v1'] + EPS)
    w1f = p['w1'] * s1
    b1f = (p['b1'] - p['m1']) * s1 + p['be1']
    s2 = p['g2'] * lax.rsqrt(p['v2'] + EPS)
    w2f = p['w2'] * s2
    b2f = (p['b2'] - p['m2']) * s2 + p['be2']

    # Fuse conv1 || downsample along Cout; fold the residual add into conv2's centre tap.
    wa = jnp.concatenate([w1f, p['wd']], axis=-1)                     # (3, Cin, 2C)
    ba = jnp.concatenate([b1f, p['bd']])                              # (2C,)
    eye = jnp.eye(Cout, dtype=jnp.float32)
    zero = jnp.zeros((Cout, Cout), jnp.float32)
    wb = jnp.stack([jnp.concatenate([w2f[0], zero], axis=0),
                    jnp.concatenate([w2f[1], eye], axis=0),
                    jnp.concatenate([w2f[2], zero], axis=0)])         # (3, 2C, C)

    # Layout glue: NCDHW -> (N, T, H', W', C) with the 1x1 spatial kernel's stride applied,
    # flattened to (N, T, S, C); bf16 activations, f32 accumulation/epilogue in the kernel.
    xt = jnp.transpose(x, (0, 2, 3, 4, 1))[:, :, ::stride, ::stride, :]
    Hs, Ws = xt.shape[2], xt.shape[3]
    xf = xt.reshape(N, T, Hs * Ws, Cin).astype(jnp.bfloat16)

    y = temporal_conv3d_block(xf, wa.astype(jnp.bfloat16), ba,
                              wb.astype(jnp.bfloat16), b2f,
                              stride=stride, out_dtype=jnp.float32)
    T1 = y.shape[1]
    return y.reshape(N, T1, Hs, Ws, Cout).transpose(0, 4, 1, 2, 3)


def init_params(key, cin, cout):
    k = jax.random.split(key, 14)
    p = {}
    p['w1'] = 0.1 * jax.random.normal(k[0], (3, cin, cout), jnp.float32)
    p['b1'] = 0.1 * jax.random.normal(k[1], (cout,), jnp.float32)
    p['g1'] = 1.0 + 0.1 * jax.random.normal(k[2], (cout,), jnp.float32)
    p['be1'] = 0.1 * jax.random.normal(k[3], (cout,), jnp.float32)
    p['m1'] = 0.1 * jax.random.normal(k[4], (cout,), jnp.float32)
    p['v1'] = jax.random.uniform(k[5], (cout,), jnp.float32, 0.5, 1.5)
    p['w2'] = 0.1 * jax.random.normal(k[6], (3, cout, cout), jnp.float32)
    p['b2'] = 0.1 * jax.random.normal(k[7], (cout,), jnp.float32)
    p['g2'] = 1.0 + 0.1 * jax.random.normal(k[8], (cout,), jnp.float32)
    p['be2'] = 0.1 * jax.random.normal(k[9], (cout,), jnp.float32)
    p['m2'] = 0.1 * jax.random.normal(k[10], (cout,), jnp.float32)
    p['v2'] = jax.random.uniform(k[11], (cout,), jnp.float32, 0.5, 1.5)
    p['wd'] = 0.1 * jax.random.normal(k[12], (3, cin, cout), jnp.float32)
    p['bd'] = 0.1 * jax.random.normal(k[13], (cout,), jnp.float32)
    return p


def ref_forward(x, p, stride):
    """Pure-JAX f32 reference (mirrors the PyTorch module, eval-mode BN)."""
    def conv(inp, w, b, s):
        w5 = jnp.transpose(w, (2, 1, 0))[:, :, :, None, None]   # (Cout, Cin, 3, 1, 1)
        y = lax.conv_general_dilated(inp, w5, window_strides=(s, s, s),
                                     padding=((1, 1), (0, 0), (0, 0)),
                                     dimension_numbers=('NCDHW', 'OIDHW', 'NCDHW'),
                                     precision=lax.Precision.HIGHEST)
        return y + b.reshape(1, -1, 1, 1, 1)

    def bn(y, g, be, m, v):
        sh = (1, -1, 1, 1, 1)
        return (y - m.reshape(sh)) / jnp.sqrt(v.reshape(sh) + EPS) * g.reshape(sh) + be.reshape(sh)

    h = conv(x, p['w1'], p['b1'], stride)
    h = jnp.maximum(bn(h, p['g1'], p['be1'], p['m1'], p['v1']), 0.0)
    h = conv(h, p['w2'], p['b2'], 1)
    h = bn(h, p['g2'], p['be2'], p['m2'], p['v2'])
    d = conv(x, p['wd'], p['bd'], stride)
    return jnp.maximum(h + d, 0.0)


if __name__ == "__main__":
    key = jax.random.PRNGKey(0)
    kx, kp = jax.random.split(key)
    N, Cin, Cout, T, H, W, stride = 2, 4, 8, 8, 16, 16, 2
    x = jax.random.normal(kx, (N, Cin, T, H, W), jnp.float32)
    params = init_params(kp, Cin, Cout)

    out = jax.block_until_ready(temporal_conv3d_forward(x, params, stride))
    ref = jax.block_until_ready(ref_forward(x, params, stride))
    assert out.shape == ref.shape, (out.shape, ref.shape)
    err = float(jnp.max(jnp.abs(out - ref)))
    assert err < 5e-2, f"max abs err {err}"
    print("KERNEL_OK")
</pallas_src>

<mosaic_0001>
module attributes {stable_mosaic.version = 11 : i64} {
  func.func @_fused_block_kernel(%arg0: i32, %arg1: i32, %arg2: memref<1x8x64x4xbf16, #tpu.memory_space<vmem>>, %arg3: memref<3x4x16xbf16, #tpu.memory_space<vmem>>, %arg4: memref<1x16xf32, #tpu.memory_space<vmem>>, %arg5: memref<3x16x8xbf16, #tpu.memory_space<vmem>>, %arg6: memref<1x8xf32, #tpu.memory_space<vmem>>, %arg7: memref<1x4x64x8xf32, #tpu.memory_space<vmem>>, %arg8: memref<4x64x16xbf16, #tpu.memory_space<vmem>>) attributes {dimension_semantics = [#tpu.dimension_semantics<parallel>, #tpu.dimension_semantics<parallel>], iteration_bounds = array<i64: 2, 1>, scalar_prefetch = 0 : i64, scratch_operands = 1 : i64, tpu.core_type = #tpu.core_type<tc>, window_params = [{transform_indices = @transform_0, window_bounds = array<i64: 1, 8, 64, 4>}, {pipeline_mode = #tpu.pipeline_mode<synchronous>, transform_indices = @transform_1, window_bounds = array<i64: 3, 4, 16>}, {pipeline_mode = #tpu.pipeline_mode<synchronous>, transform_indices = @transform_2, window_bounds = array<i64: 1, 16>}, {pipeline_mode = #tpu.pipeline_mode<synchronous>, transform_indices = @transform_3, window_bounds = array<i64: 3, 16, 8>}, {pipeline_mode = #tpu.pipeline_mode<synchronous>, transform_indices = @transform_4, window_bounds = array<i64: 1, 8>}, {transform_indices = @transform_5, window_bounds = array<i64: 1, 4, 64, 8>}]} {
    %c0 = arith.constant 0 : index
    %c0_0 = arith.constant 0 : index
    %c0_1 = arith.constant 0 : index
    %0 = vector.load %arg3[%c0, %c0_0, %c0_1] : memref<3x4x16xbf16, #tpu.memory_space<vmem>>, vector<1x4x16xbf16>
    %1 = vector.shape_cast %0 : vector<1x4x16xbf16> to vector<4x16xbf16>
    %c1 = arith.constant 1 : index
    %c0_2 = arith.constant 0 : index
    %c0_3 = arith.constant 0 : index
    %2 = vector.load %arg3[%c1, %c0_2, %c0_3] : memref<3x4x16xbf16, #tpu.memory_space<vmem>>, vector<1x4x16xbf16>
    %3 = vector.shape_cast %2 : vector<1x4x16xbf16> to vector<4x16xbf16>
    %c2 = arith.constant 2 : index
    %c0_4 = arith.constant 0 : index
    %c0_5 = arith.constant 0 : index
    %4 = vector.load %arg3[%c2, %c0_4, %c0_5] : memref<3x4x16xbf16, #tpu.memory_space<vmem>>, vector<1x4x16xbf16>
    %5 = vector.shape_cast %4 : vector<1x4x16xbf16> to vector<4x16xbf16>
    %c0_6 = arith.constant 0 : index
    %c0_7 = arith.constant 0 : index
    %c0_8 = arith.constant 0 : index
    %6 = vector.load %arg5[%c0_6, %c0_7, %c0_8] : memref<3x16x8xbf16, #tpu.memory_space<vmem>>, vector<1x16x8xbf16>
    %7 = vector.shape_cast %6 : vector<1x16x8xbf16> to vector<16x8xbf16>
    %c1_9 = arith.constant 1 : index
    %c0_10 = arith.constant 0 : index
    %c0_11 = arith.constant 0 : index
    %8 = vector.load %arg5[%c1_9, %c0_10, %c0_11] : memref<3x16x8xbf16, #tpu.memory_space<vmem>>, vector<1x16x8xbf16>
    %9 = vector.shape_cast %8 : vector<1x16x8xbf16> to vector<16x8xbf16>
    %c2_12 = arith.constant 2 : index
    %c0_13 = arith.constant 0 : index
    %c0_14 = arith.constant 0 : index
    %10 = vector.load %arg5[%c2_12, %c0_13, %c0_14] : memref<3x16x8xbf16, #tpu.memory_space<vmem>>, vector<1x16x8xbf16>
    %11 = vector.shape_cast %10 : vector<1x16x8xbf16> to vector<16x8xbf16>
    %c0_15 = arith.constant 0 : index
    %c0_16 = arith.constant 0 : index
    %12 = vector.load %arg4[%c0_15, %c0_16] : memref<1x16xf32, #tpu.memory_space<vmem>>, vector<1x16xf32>
    %c0_17 = arith.constant 0 : index
    %c0_18 = arith.constant 0 : index
    %13 = vector.load %arg6[%c0_17, %c0_18] : memref<1x8xf32, #tpu.memory_space<vmem>>, vector<1x8xf32>
    %14 = tpu.iota {dimensions = array<i32: 1>} : vector<64x16xi32>
    %c8_i32 = arith.constant 8 : i32
    %15 = vector.broadcast %c8_i32 : i32 to vector<64x16xi32>
    %16 = arith.cmpi slt, %14, %15 : vector<64x16xi32>
    %c0_19 = arith.constant 0 : index
    %c0_20 = arith.constant 0 : index
    %c0_21 = arith.constant 0 : index
    %c0_22 = arith.constant 0 : index
    %17 = vector.load %arg2[%c0_19, %c0_20, %c0_21, %c0_22] : memref<1x8x64x4xbf16, #tpu.memory_space<vmem>>, vector<1x1x64x4xbf16>
    %18 = vector.shape_cast %17 : vector<1x1x64x4xbf16> to vector<64x4xbf16>
    %cst = arith.constant dense<0.000000e+00> : vector<64x16xf32>
    %19 = tpu.matmul %18, %3, %cst {dimension_numbers = #tpu.dot_dimension_numbers<[1], [0], [0], [1], [0, 0, 1, 1], [], []>} : vector<64x4xbf16>, vector<4x16xbf16>, vector<64x16xf32> -> vector<64x16xf32>
    %20 = vector.broadcast %12 : vector<1x16xf32> to vector<64x16xf32>
    %21 = arith.addf %20, %19 : vector<64x16xf32>
    %c0_23 = arith.constant 0 : index
    %c1_24 = arith.constant 1 : index
    %c0_25 = arith.constant 0 : index
    %c0_26 = arith.constant 0 : index
    %22 = vector.load %arg2[%c0_23, %c1_24, %c0_25, %c0_26] : memref<1x8x64x4xbf16, #tpu.memory_space<vmem>>, vector<1x1x64x4xbf16>
    %23 = vector.shape_cast %22 : vector<1x1x64x4xbf16> to vector<64x4xbf16>
    %cst_27 = arith.constant dense<0.000000e+00> : vector<64x16xf32>
    %24 = tpu.matmul %23, %5, %cst_27 {dimension_numbers = #tpu.dot_dimension_numbers<[1], [0], [0], [1], [0, 0, 1, 1], [], []>} : vector<64x4xbf16>, vector<4x16xbf16>, vector<64x16xf32> -> vector<64x16xf32>
    %25 = arith.addf %21, %24 : vector<64x16xf32>
    %cst_28 = arith.constant 0.000000e+00 : f32
    %26 = vector.broadcast %cst_28 : f32 to vector<64x16xf32>
    %27 = arith.maximumf %25, %26 : vector<64x16xf32>
    %28 = arith.select %16, %27, %25 : vector<64x16xi1>, vector<64x16xf32>
    %29 = arith.truncf %28 : vector<64x16xf32> to vector<64x16xbf16>
    %c0_29 = arith.constant 0 : index
    %c0_30 = arith.constant 0 : index
    %c0_31 = arith.constant 0 : index
    %30 = vector.load %arg8[%c0_29, %c0_30, %c0_31] : memref<4x64x16xbf16, #tpu.memory_space<vmem>>, vector<1x64x16xbf16>
    %31 = vector.shape_cast %30 : vector<1x64x16xbf16> to vector<64x16xbf16>
    %32 = vector.shape_cast %29 : vector<64x16xbf16> to vector<1x64x16xbf16>
    tpu.vector_store %arg8[%c0_29, %c0_30, %c0_31], %32 {strides = array<i32>} : memref<4x64x16xbf16, #tpu.memory_space<vmem>>, vector<1x64x16xbf16>,
    %c0_32 = arith.constant 0 : index
    %c1_33 = arith.constant 1 : index
    %c0_34 = arith.constant 0 : index
    %c0_35 = arith.constant 0 : index
    %33 = vector.load %arg2[%c0_32, %c1_33, %c0_34, %c0_35] : memref<1x8x64x4xbf16, #tpu.memory_space<vmem>>, vector<1x1x64x4xbf16>
    %34 = vector.shape_cast %33 : vector<1x1x64x4xbf16> to vector<64x4xbf16>
    %cst_36 = arith.constant dense<0.000000e+00> : vector<64x16xf32>
    %35 = tpu.matmul %34, %1, %cst_36 {dimension_numbers = #tpu.dot_dimension_numbers<[1], [0], [0], [1], [0, 0, 1, 1], [], []>} : vector<64x4xbf16>, vector<4x16xbf16>, vector<64x16xf32> -> vector<64x16xf32>
    %36 = vector.broadcast %12 : vector<1x16xf32> to vector<64x16xf32>
    %37 = arith.addf %36, %35 : vector<64x16xf32>
    %c0_37 = arith.constant 0 : index
    %c2_38 = arith.constant 2 : index
    %c0_39 = arith.constant 0 : index
    %c0_40 = arith.constant 0 : index
    %38 = vector.load %arg2[%c0_37, %c2_38, %c0_39, %c0_40] : memref<1x8x64x4xbf16, #tpu.memory_space<vmem>>, vector<1x1x64x4xbf16>
    %39 = vector.shape_cast %38 : vector<1x1x64x4xbf16> to vector<64x4xbf16>
    %cst_41 = arith.constant dense<0.000000e+00> : vector<64x16xf32>
    %40 = tpu.matmul %39, %3, %cst_41 {dimension_numbers = #tpu.dot_dimension_numbers<[1], [0], [0], [1], [0, 0, 1, 1], [], []>} : vector<64x4xbf16>, vector<4x16xbf16>, vector<64x16xf32> -> vector<64x16xf32>
    %41 = arith.addf %37, %40 : vector<64x16xf32>
    %c0_42 = arith.constant 0 : index
    %c3 = arith.constant 3 : index
    %c0_43 = arith.constant 0 : index
    %c0_44 = arith.constant 0 : index
    %42 = vector.load %arg2[%c0_42, %c3, %c0_43, %c0_44] : memref<1x8x64x4xbf16, #tpu.memory_space<vmem>>, vector<1x1x64x4xbf16>
    %43 = vector.shape_cast %42 : vector<1x1x64x4xbf16> to vector<64x4xbf16>
    %cst_45 = arith.constant dense<0.000000e+00> : vector<64x16xf32>
    %44 = tpu.matmul %43, %5, %cst_45 {dimension_numbers = #tpu.dot_dimension_numbers<[1], [0], [0], [1], [0, 0, 1, 1], [], []>} : vector<64x4xbf16>, vector<4x16xbf16>, vector<64x16xf32> -> vector<64x16xf32>
    %45 = arith.addf %41, %44 : vector<64x16xf32>
    %cst_46 = arith.constant 0.000000e+00 : f32
    %46 = vector.broadcast %cst_46 : f32 to vector<64x16xf32>
    %47 = arith.maximumf %45, %46 : vector<64x16xf32>
    %48 = arith.select %16, %47, %45 : vector<64x16xi1>, vector<64x16xf32>
    %49 = arith.truncf %48 : vector<64x16xf32> to vector<64x16xbf16>
    %c1_47 = arith.constant 1 : index
    %c0_48 = arith.constant 0 : index
    %c0_49 = arith.constant 0 : index
    %50 = vector.load %arg8[%c1_47, %c0_48, %c0_49] : memref<4x64x16xbf16, #tpu.memory_space<vmem>>, vector<1x64x16xbf16>
    %51 = vector.shape_cast %50 : vector<1x64x16xbf16> to vector<64x16xbf16>
    %52 = vector.shape_cast %49 : vector<64x16xbf16> to vector<1x64x16xbf16>
    tpu.vector_store %arg8[%c1_47, %c0_48, %c0_49], %52 {strides = array<i32>} : memref<4x64x16xbf16, #tpu.memory_space<vmem>>, vector<1x64x16xbf16>,
    %c0_50 = arith.constant 0 : index
    %c3_51 = arith.constant 3 : index
    %c0_52 = arith.constant 0 : index
    %c0_53 = arith.constant 0 : index
    %53 = vector.load %arg2[%c0_50, %c3_51, %c0_52, %c0_53] : memref<1x8x64x4xbf16, #tpu.memory_space<vmem>>, vector<1x1x64x4xbf16>
    %54 = vector.shape_cast %53 : vector<1x1x64x4xbf16> to vector<64x4xbf16>
    %cst_54 = arith.constant dense<0.000000e+00> : vector<64x16xf32>
    %55 = tpu.matmul %54, %1, %cst_54 {dimension_numbers = #tpu.dot_dimension_numbers<[1], [0], [0], [1], [0, 0, 1, 1], [], []>} : vector<64x4xbf16>, vector<4x16xbf16>, vector<64x16xf32> -> vector<64x16xf32>
    %56 = vector.broadcast %12 : vector<1x16xf32> to vector<64x16xf32>
    %57 = arith.addf %56, %55 : vector<64x16xf32>
    %c0_55 = arith.constant 0 : index
    %c4 = arith.constant 4 : index
    %c0_56 = arith.constant 0 : index
    %c0_57 = arith.constant 0 : index
    %58 = vector.load %arg2[%c0_55, %c4, %c0_56, %c0_57] : memref<1x8x64x4xbf16, #tpu.memory_space<vmem>>, vector<1x1x64x4xbf16>
    %59 = vector.shape_cast %58 : vector<1x1x64x4xbf16> to vector<64x4xbf16>
    %cst_58 = arith.constant dense<0.000000e+00> : vector<64x16xf32>
    %60 = tpu.matmul %59, %3, %cst_58 {dimension_numbers = #tpu.dot_dimension_numbers<[1], [0], [0], [1], [0, 0, 1, 1], [], []>} : vector<64x4xbf16>, vector<4x16xbf16>, vector<64x16xf32> -> vector<64x16xf32>
    %61 = arith.addf %57, %60 : vector<64x16xf32>
    %c0_59 = arith.constant 0 : index
    %c5 = arith.constant 5 : index
    %c0_60 = arith.constant 0 : index
    %c0_61 = arith.constant 0 : index
    %62 = vector.load %arg2[%c0_59, %c5, %c0_60, %c0_61] : memref<1x8x64x4xbf16, #tpu.memory_space<vmem>>, vector<1x1x64x4xbf16>
    %63 = vector.shape_cast %62 : vector<1x1x64x4xbf16> to vector<64x4xbf16>
    %cst_62 = arith.constant dense<0.000000e+00> : vector<64x16xf32>
    %64 = tpu.matmul %63, %5, %cst_62 {dimension_numbers = #tpu.dot_dimension_numbers<[1], [0], [0], [1], [0, 0, 1, 1], [], []>} : vector<64x4xbf16>, vector<4x16xbf16>, vector<64x16xf32> -> vector<64x16xf32>
    %65 = arith.addf %61, %64 : vector<64x16xf32>
    %cst_63 = arith.constant 0.000000e+00 : f32
    %66 = vector.broadcast %cst_63 : f32 to vector<64x16xf32>
    %67 = arith.maximumf %65, %66 : vector<64x16xf32>
    %68 = arith.select %16, %67, %65 : vector<64x16xi1>, vector<64x16xf32>
    %69 = arith.truncf %68 : vector<64x16xf32> to vector<64x16xbf16>
    %c2_64 = arith.constant 2 : index
    %c0_65 = arith.constant 0 : index
    %c0_66 = arith.constant 0 : index
    %70 = vector.load %arg8[%c2_64, %c0_65, %c0_66] : memref<4x64x16xbf16, #tpu.memory_space<vmem>>, vector<1x64x16xbf16>
    %71 = vector.shape_cast %70 : vector<1x64x16xbf16> to vector<64x16xbf16>
    %72 = vector.shape_cast %69 : vector<64x16xbf16> to vector<1x64x16xbf16>
    tpu.vector_store %arg8[%c2_64, %c0_65, %c0_66], %72 {strides = array<i32>} : memref<4x64x16xbf16, #tpu.memory_space<vmem>>, vector<1x64x16xbf16>,
    %c0_67 = arith.constant 0 : index
    %c5_68 = arith.constant 5 : index
    %c0_69 = arith.constant 0 : index
    %c0_70 = arith.constant 0 : index
    %73 = vector.load %arg2[%c0_67, %c5_68, %c0_69, %c0_70] : memref<1x8x64x4xbf16, #tpu.memory_space<vmem>>, vector<1x1x64x4xbf16>
    %74 = vector.shape_cast %73 : vector<1x1x64x4xbf16> to vector<64x4xbf16>
    %cst_71 = arith.constant dense<0.000000e+00> : vector<64x16xf32>
    %75 = tpu.matmul %74, %1, %cst_71 {dimension_numbers = #tpu.dot_dimension_numbers<[1], [0], [0], [1], [0, 0, 1, 1], [], []>} : vector<64x4xbf16>, vector<4x16xbf16>, vector<64x16xf32> -> vector<64x16xf32>
    %76 = vector.broadcast %12 : vector<1x16xf32> to vector<64x16xf32>
    %77 = arith.addf %76, %75 : vector<64x16xf32>
    %c0_72 = arith.constant 0 : index
    %c6 = arith.constant 6 : index
    %c0_73 = arith.constant 0 : index
    %c0_74 = arith.constant 0 : index
    %78 = vector.load %arg2[%c0_72, %c6, %c0_73, %c0_74] : memref<1x8x64x4xbf16, #tpu.memory_space<vmem>>, vector<1x1x64x4xbf16>
    %79 = vector.shape_cast %78 : vector<1x1x64x4xbf16> to vector<64x4xbf16>
    %cst_75 = arith.constant dense<0.000000e+00> : vector<64x16xf32>
    %80 = tpu.matmul %79, %3, %cst_75 {dimension_numbers = #tpu.dot_dimension_numbers<[1], [0], [0], [1], [0, 0, 1, 1], [], []>} : vector<64x4xbf16>, vector<4x16xbf16>, vector<64x16xf32> -> vector<64x16xf32>
    %81 = arith.addf %77, %80 : vector<64x16xf32>
    %c0_76 = arith.constant 0 : index
    %c7 = arith.constant 7 : index
    %c0_77 = arith.constant 0 : index
    %c0_78 = arith.constant 0 : index
    %82 = vector.load %arg2[%c0_76, %c7, %c0_77, %c0_78] : memref<1x8x64x4xbf16, #tpu.memory_space<vmem>>, vector<1x1x64x4xbf16>
    %83 = vector.shape_cast %82 : vector<1x1x64x4xbf16> to vector<64x4xbf16>
    %cst_79 = arith.constant dense<0.000000e+00> : vector<64x16xf32>
    %84 = tpu.matmul %83, %5, %cst_79 {dimension_numbers = #tpu.dot_dimension_numbers<[1], [0], [0], [1], [0, 0, 1, 1], [], []>} : vector<64x4xbf16>, vector<4x16xbf16>, vector<64x16xf32> -> vector<64x16xf32>
    %85 = arith.addf %81, %84 : vector<64x16xf32>
    %cst_80 = arith.constant 0.000000e+00 : f32
    %86 = vector.broadcast %cst_80 : f32 to vector<64x16xf32>
    %87 = arith.maximumf %85, %86 : vector<64x16xf32>
    %88 = arith.select %16, %87, %85 : vector<64x16xi1>, vector<64x16xf32>
    %89 = arith.truncf %88 : vector<64x16xf32> to vector<64x16xbf16>
    %c3_81 = arith.constant 3 : index
    %c0_82 = arith.constant 0 : index
    %c0_83 = arith.constant 0 : index
    %90 = vector.load %arg8[%c3_81, %c0_82, %c0_83] : memref<4x64x16xbf16, #tpu.memory_space<vmem>>, vector<1x64x16xbf16>
    %91 = vector.shape_cast %90 : vector<1x64x16xbf16> to vector<64x16xbf16>
    %92 = vector.shape_cast %89 : vector<64x16xbf16> to vector<1x64x16xbf16>
    tpu.vector_store %arg8[%c3_81, %c0_82, %c0_83], %92 {strides = array<i32>} : memref<4x64x16xbf16, #tpu.memory_space<vmem>>, vector<1x64x16xbf16>,
    %c0_84 = arith.constant 0 : index
    %c0_85 = arith.constant 0 : index
    %c0_86 = arith.constant 0 : index
    %93 = vector.load %arg8[%c0_84, %c0_85, %c0_86] : memref<4x64x16xbf16, #tpu.memory_space<vmem>>, vector<1x64x16xbf16>
    %94 = vector.shape_cast %93 : vector<1x64x16xbf16> to vector<64x16xbf16>
    %cst_87 = arith.constant dense<0.000000e+00> : vector<64x8xf32>
    %95 = tpu.matmul %94, %9, %cst_87 {dimension_numbers = #tpu.dot_dimension_numbers<[1], [0], [0], [1], [0, 0, 1, 1], [], []>} : vector<64x16xbf16>, vector<16x8xbf16>, vector<64x8xf32> -> vector<64x8xf32>
    %96 = vector.broadcast %13 : vector<1x8xf32> to vector<64x8xf32>
    %97 = arith.addf %96, %95 : vector<64x8xf32>
    %c1_88 = arith.constant 1 : index
    %c0_89 = arith.constant 0 : index
    %c0_90 = arith.constant 0 : index
    %98 = vector.load %arg8[%c1_88, %c0_89, %c0_90] : memref<4x64x16xbf16, #tpu.memory_space<vmem>>, vector<1x64x16xbf16>
    %99 = vector.shape_cast %98 : vector<1x64x16xbf16> to vector<64x16xbf16>
    %cst_91 = arith.constant dense<0.000000e+00> : vector<64x8xf32>
    %100 = tpu.matmul %99, %11, %cst_91 {dimension_numbers = #tpu.dot_dimension_numbers<[1], [0], [0], [1], [0, 0, 1, 1], [], []>} : vector<64x16xbf16>, vector<16x8xbf16>, vector<64x8xf32> -> vector<64x8xf32>
    %101 = arith.addf %97, %100 : vector<64x8xf32>
    %cst_92 = arith.constant 0.000000e+00 : f32
    %102 = vector.broadcast %cst_92 : f32 to vector<64x8xf32>
    %103 = arith.maximumf %101, %102 : vector<64x8xf32>
    %c0_93 = arith.constant 0 : index
    %c0_94 = arith.constant 0 : index
    %c0_95 = arith.constant 0 : index
    %c0_96 = arith.constant 0 : index
    %104 = vector.load %arg7[%c0_93, %c0_94, %c0_95, %c0_96] : memref<1x4x64x8xf32, #tpu.memory_space<vmem>>, vector<1x1x64x8xf32>
    %105 = vector.shape_cast %104 : vector<1x1x64x8xf32> to vector<64x8xf32>
    %106 = vector.shape_cast %103 : vector<64x8xf32> to vector<1x1x64x8xf32>
    tpu.vector_store %arg7[%c0_93, %c0_94, %c0_95, %c0_96], %106 {strides = array<i32>} : memref<1x4x64x8xf32, #tpu.memory_space<vmem>>, vector<1x1x64x8xf32>,
    %c0_97 = arith.constant 0 : index
    %c0_98 = arith.constant 0 : index
    %c0_99 = arith.constant 0 : index
    %107 = vector.load %arg8[%c0_97, %c0_98, %c0_99] : memref<4x64x16xbf16, #tpu.memory_space<vmem>>, vector<1x64x16xbf16>
    %108 = vector.shape_cast %107 : vector<1x64x16xbf16> to vector<64x16xbf16>
    %cst_100 = arith.constant dense<0.000000e+00> : vector<64x8xf32>
    %109 = tpu.matmul %108, %7, %cst_100 {dimension_numbers = #tpu.dot_dimension_numbers<[1], [0], [0], [1], [0, 0, 1, 1], [], []>} : vector<64x16xbf16>, vector<16x8xbf16>, vector<64x8xf32> -> vector<64x8xf32>
    %110 = vector.broadcast %13 : vector<1x8xf32> to vector<64x8xf32>
    %111 = arith.addf %110, %109 : vector<64x8xf32>
    %c1_101 = arith.constant 1 : index
    %c0_102 = arith.constant 0 : index
    %c0_103 = arith.constant 0 : index
    %112 = vector.load %arg8[%c1_101, %c0_102, %c0_103] : memref<4x64x16xbf16, #tpu.memory_space<vmem>>, vector<1x64x16xbf16>
    %113 = vector.shape_cast %112 : vector<1x64x16xbf16> to vector<64x16xbf16>
    %cst_104 = arith.constant dense<0.000000e+00> : vector<64x8xf32>
    %114 = tpu.matmul %113, %9, %cst_104 {dimension_numbers = #tpu.dot_dimension_numbers<[1], [0], [0], [1], [0, 0, 1, 1], [], []>} : vector<64x16xbf16>, vector<16x8xbf16>, vector<64x8xf32> -> vector<64x8xf32>
    %115 = arith.addf %111, %114 : vector<64x8xf32>
    %c2_105 = arith.constant 2 : index
    %c0_106 = arith.constant 0 : index
    %c0_107 = arith.constant 0 : index
    %116 = vector.load %arg8[%c2_105, %c0_106, %c0_107] : memref<4x64x16xbf16, #tpu.memory_space<vmem>>, vector<1x64x16xbf16>
    %117 = vector.shape_cast %116 : vector<1x64x16xbf16> to vector<64x16xbf16>
    %cst_108 = arith.constant dense<0.000000e+00> : vector<64x8xf32>
    %118 = tpu.matmul %117, %11, %cst_108 {dimension_numbers = #tpu.dot_dimension_numbers<[1], [0], [0], [1], [0, 0, 1, 1], [], []>} : vector<64x16xbf16>, vector<16x8xbf16>, vector<64x8xf32> -> vector<64x8xf32>
    %119 = arith.addf %115, %118 : vector<64x8xf32>
    %cst_109 = arith.constant 0.000000e+00 : f32
    %120 = vector.broadcast %cst_109 : f32 to vector<64x8xf32>
    %121 = arith.maximumf %119, %120 : vector<64x8xf32>
    %c0_110 = arith.constant 0 : index
    %c1_111 = arith.constant 1 : index
    %c0_112 = arith.constant 0 : index
    %c0_113 = arith.constant 0 : index
    %122 = vector.load %arg7[%c0_110, %c1_111, %c0_112, %c0_113] : memref<1x4x64x8xf32, #tpu.memory_space<vmem>>, vector<1x1x64x8xf32>
    %123 = vector.shape_cast %122 : vector<1x1x64x8xf32> to vector<64x8xf32>
    %124 = vector.shape_cast %121 : vector<64x8xf32> to vector<1x1x64x8xf32>
    tpu.vector_store %arg7[%c0_110, %c1_111, %c0_112, %c0_113], %124 {strides = array<i32>} : memref<1x4x64x8xf32, #tpu.memory_space<vmem>>, vector<1x1x64x8xf32>,
    %c1_114 = arith.constant 1 : index
    %c0_115 = arith.constant 0 : index
    %c0_116 = arith.constant 0 : index
    %125 = vector.load %arg8[%c1_114, %c0_115, %c0_116] : memref<4x64x16xbf16, #tpu.memory_space<vmem>>, vector<1x64x16xbf16>
    %126 = vector.shape_cast %125 : vector<1x64x16xbf16> to vector<64x16xbf16>
    %cst_117 = arith.constant dense<0.000000e+00> : vector<64x8xf32>
    %127 = tpu.matmul %126, %7, %cst_117 {dimension_numbers = #tpu.dot_dimension_numbers<[1], [0], [0], [1], [0, 0, 1, 1], [], []>} : vector<64x16xbf16>, vector<16x8xbf16>, vector<64x8xf32> -> vector<64x8xf32>
    %128 = vector.broadcast %13 : vector<1x8xf32> to vector<64x8xf32>
    %129 = arith.addf %128, %127 : vector<64x8xf32>
    %c2_118 = arith.constant 2 : index
    %c0_119 = arith.constant 0 : index
    %c0_120 = arith.constant 0 : index
    %130 = vector.load %arg8[%c2_118, %c0_119, %c0_120] : memref<4x64x16xbf16, #tpu.memory_space<vmem>>, vector<1x64x16xbf16>
    %131 = vector.shape_cast %130 : vector<1x64x16xbf16> to vector<64x16xbf16>
    %cst_121 = arith.constant dense<0.000000e+00> : vector<64x8xf32>
    %132 = tpu.matmul %131, %9, %cst_121 {dimension_numbers = #tpu.dot_dimension_numbers<[1], [0], [0], [1], [0, 0, 1, 1], [], []>} : vector<64x16xbf16>, vector<16x8xbf16>, vector<64x8xf32> -> vector<64x8xf32>
    %133 = arith.addf %129, %132 : vector<64x8xf32>
    %c3_122 = arith.constant 3 : index
    %c0_123 = arith.constant 0 : index
    %c0_124 = arith.constant 0 : index
    %134 = vector.load %arg8[%c3_122, %c0_123, %c0_124] : memref<4x64x16xbf16, #tpu.memory_space<vmem>>, vector<1x64x16xbf16>
    %135 = vector.shape_cast %134 : vector<1x64x16xbf16> to vector<64x16xbf16>
    %cst_125 = arith.constant dense<0.000000e+00> : vector<64x8xf32>
    %136 = tpu.matmul %135, %11, %cst_125 {dimension_numbers = #tpu.dot_dimension_numbers<[1], [0], [0], [1], [0, 0, 1, 1], [], []>} : vector<64x16xbf16>, vector<16x8xbf16>, vector<64x8xf32> -> vector<64x8xf32>
    %137 = arith.addf %133, %136 : vector<64x8xf32>
    %cst_126 = arith.constant 0.000000e+00 : f32
    %138 = vector.broadcast %cst_126 : f32 to vector<64x8xf32>
    %139 = arith.maximumf %137, %138 : vector<64x8xf32>
    %c0_127 = arith.constant 0 : index
    %c2_128 = arith.constant 2 : index
    %c0_129 = arith.constant 0 : index
    %c0_130 = arith.constant 0 : index
    %140 = vector.load %arg7[%c0_127, %c2_128, %c0_129, %c0_130] : memref<1x4x64x8xf32, #tpu.memory_space<vmem>>, vector<1x1x64x8xf32>
    %141 = vector.shape_cast %140 : vector<1x1x64x8xf32> to vector<64x8xf32>
    %142 = vector.shape_cast %139 : vector<64x8xf32> to vector<1x1x64x8xf32>
    tpu.vector_store %arg7[%c0_127, %c2_128, %c0_129, %c0_130], %142 {strides = array<i32>} : memref<1x4x64x8xf32, #tpu.memory_space<vmem>>, vector<1x1x64x8xf32>,
    %c2_131 = arith.constant 2 : index
    %c0_132 = arith.constant 0 : index
    %c0_133 = arith.constant 0 : index
    %143 = vector.load %arg8[%c2_131, %c0_132, %c0_133] : memref<4x64x16xbf16, #tpu.memory_space<vmem>>, vector<1x64x16xbf16>
    %144 = vector.shape_cast %143 : vector<1x64x16xbf16> to vector<64x16xbf16>
    %cst_134 = arith.constant dense<0.000000e+00> : vector<64x8xf32>
    %145 = tpu.matmul %144, %7, %cst_134 {dimension_numbers = #tpu.dot_dimension_numbers<[1], [0], [0], [1], [0, 0, 1, 1], [], []>} : vector<64x16xbf16>, vector<16x8xbf16>, vector<64x8xf32> -> vector<64x8xf32>
    %146 = vector.broadcast %13 : vector<1x8xf32> to vector<64x8xf32>
    %147 = arith.addf %146, %145 : vector<64x8xf32>
    %c3_135 = arith.constant 3 : index
    %c0_136 = arith.constant 0 : index
    %c0_137 = arith.constant 0 : index
    %148 = vector.load %arg8[%c3_135, %c0_136, %c0_137] : memref<4x64x16xbf16, #tpu.memory_space<vmem>>, vector<1x64x16xbf16>
    %149 = vector.shape_cast %148 : vector<1x64x16xbf16> to vector<64x16xbf16>
    %cst_138 = arith.constant dense<0.000000e+00> : vector<64x8xf32>
    %150 = tpu.matmul %149, %9, %cst_138 {dimension_numbers = #tpu.dot_dimension_numbers<[1], [0], [0], [1], [0, 0, 1, 1], [], []>} : vector<64x16xbf16>, vector<16x8xbf16>, vector<64x8xf32> -> vector<64x8xf32>
    %151 = arith.addf %147, %150 : vector<64x8xf32>
    %cst_139 = arith.constant 0.000000e+00 : f32
    %152 = vector.broadcast %cst_139 : f32 to vector<64x8xf32>
    %153 = arith.maximumf %151, %152 : vector<64x8xf32>
    %c0_140 = arith.constant 0 : index
    %c3_141 = arith.constant 3 : index
    %c0_142 = arith.constant 0 : index
    %c0_143 = arith.constant 0 : index
    %154 = vector.load %arg7[%c0_140, %c3_141, %c0_142, %c0_143] : memref<1x4x64x8xf32, #tpu.memory_space<vmem>>, vector<1x1x64x8xf32>
    %155 = vector.shape_cast %154 : vector<1x1x64x8xf32> to vector<64x8xf32>
    %156 = vector.shape_cast %153 : vector<64x8xf32> to vector<1x1x64x8xf32>
    tpu.vector_store %arg7[%c0_140, %c3_141, %c0_142, %c0_143], %156 {strides = array<i32>} : memref<1x4x64x8xf32, #tpu.memory_space<vmem>>, vector<1x1x64x8xf32>,
    return
  }
  func.func @transform_0(%arg0: i32, %arg1: i32) -> (i32, i32, i32, i32) {
    %c0_i32 = arith.constant 0 : i32
    %c0_i32_0 = arith.constant 0 : i32
    %c0_i32_1 = arith.constant 0 : i32
    return %arg0, %c0_i32, %arg1, %c0_i32_0 : i32, i32, i32, i32
  }
  func.func @transform_1(%arg0: i32, %arg1: i32) -> (i32, i32, i32) {
    %c0_i32 = arith.constant 0 : i32
    %c0_i32_0 = arith.constant 0 : i32
    %c0_i32_1 = arith.constant 0 : i32
    %c0_i32_2 = arith.constant 0 : i32
    return %c0_i32, %c0_i32_0, %c0_i32_1 : i32, i32, i32
  }
  func.func @transform_2(%arg0: i32, %arg1: i32) -> (i32, i32) {
    %c0_i32 = arith.constant 0 : i32
    %c0_i32_0 = arith.constant 0 : i32
    %c0_i32_1 = arith.constant 0 : i32
    return %c0_i32, %c0_i32_0 : i32, i32
  }
  func.func @transform_3(%arg0: i32, %arg1: i32) -> (i32, i32, i32) {
    %c0_i32 = arith.constant 0 : i32
    %c0_i32_0 = arith.constant 0 : i32
    %c0_i32_1 = arith.constant 0 : i32
    %c0_i32_2 = arith.constant 0 : i32
    return %c0_i32, %c0_i32_0, %c0_i32_1 : i32, i32, i32
  }
  func.func @transform_4(%arg0: i32, %arg1: i32) -> (i32, i32) {
    %c0_i32 = arith.constant 0 : i32
    %c0_i32_0 = arith.constant 0 : i32
    %c0_i32_1 = arith.constant 0 : i32
    return %c0_i32, %c0_i32_0 : i32, i32
  }
  func.func @transform_5(%arg0: i32, %arg1: i32) -> (i32, i32, i32, i32) {
    %c0_i32 = arith.constant 0 : i32
    %c0_i32_0 = arith.constant 0 : i32
    %c0_i32_1 = arith.constant 0 : i32
    return %arg0, %c0_i32, %arg1, %c0_i32_0 : i32, i32, i32, i32
  }
}

</mosaic_0001>

<llo_original>
// kernel: tpu_custom_call.1
$region0: #{tpu_custom_call.1}
  #allocation0 [shape = 'u32[]', space=smem, size = 0x4, offset = 0x4, fixed_abs, tag = 'smem constant byte address 0x4 - core index']
  #allocation1 [shape = 'u32[72,128]{1,0:T(1,128)}', space=vmem, size = 0x9000, scoped, tag = 'internal scratch']
  #allocation2 [shape = 'bf16[4,64,16]{2,1,0:T(8,128)(2,1)}', space=vmem, size = 0x10000, scoped, tag = 'scratch operand']
  %s0 = inlined_call_operand.vmem [shape: bf16[2,8,64,4], index: 0, kind: input, shape index: {}]
  %s1 = inlined_call_operand.vmem [shape: bf16[3,4,16], index: 1, kind: input, shape index: {}]
  %s2 = inlined_call_operand.vmem [shape: f32[1,16], index: 2, kind: input, shape index: {}]
  %s3 = inlined_call_operand.vmem [shape: bf16[3,16,8], index: 3, kind: input, shape index: {}]
  %s4 = inlined_call_operand.vmem [shape: f32[1,8], index: 4, kind: input, shape index: {}]
  %s5 = inlined_call_operand.vmem [shape: f32[2,4,64,8], index: 5, kind: output, shape index: {}]
  %s6 = sld [smem:[#allocation0]]
  $region53: #{tpu_custom_call.1} parent=0
    _
  %s8 = ssub.s32 1, %s6
  %s9 = scalar_select 0, %s8, %s6
  loop: start=0, step=1, limit=4
  $region2: #{tpu_custom_call.1} parent=0 // loop_pre_header
    _
  $region3: #{tpu_custom_call.1} parent=0 // loop_header
    %s11 = sphi 0, %s15
    %p12 = scmp.ge.s32.totalorder %s11, 4
    %s18 = sphi 0, %s30
    %s19 = sphi 0, %s26
    %s20 = sphi 0, %s18
    %s21 = sphi 0, %s19
    %s22 = sphi 0, %s20
    %s23 = sphi 0, %s21
    %s35 = sphi 0, %s37
    %s38 = sphi 0, %s35
    %s39 = sphi 0, %s38
    %s55 = sphi 0, %s39
    %s59 = sphi 0, %s59
    %s61 = sphi 0, %s59
    %s62 = sphi 0, %s61
    %s76 = sphi 0, %s62
    %s80 = sphi 0, %s80
    %s82 = sphi 0, %s80
    %s83 = sphi 0, %s82
    %s97 = sphi 0, %s83
    %s101 = sphi 0, %s101
    %s103 = sphi 0, %s101
    %s104 = sphi 0, %s103
    %s118 = sphi 0, %s104
    %s122 = sphi 0, %s122
    %s124 = sphi 0, %s122
    %s125 = sphi 0, %s124
    %s139 = sphi 0, %s125
    %s147 = sphi 0, %s149
    %s150 = sphi 0, %s147
    %s151 = sphi 0, %s150
    %s167 = sphi 0, %s151
  $region4: #{tpu_custom_call.1} parent=0 // loop_header_branch
    %14 = sbr.rel (%p12) target = $region8
  $region5: #{tpu_custom_call.1} parent=0 // loop_body
    %s16 = ssub.s32 %s11, 1
    %s17 = ssub.s32 %s11, 2
    %s24 = sadd.s32 1, %s19
    %p25 = scmp.ge.s32.totalorder %s24, 1
    %s26 = scalar_select %p25, 0, %s24
    %s27 = sadd.s32 1, %s18
    %s28 = scalar_select %p25, %s27, %s18
    %p29 = scmp.ge.s32.totalorder %s28, 2
    %s30 = scalar_select %p29, 0, %s28
    %s31 = ssub.s32 %s18, %s30
    %s32 = ssub.s32 %s19, %s26
    %s33 = sor.u32 %s31, %s32
    %p34 = scmp.eq.s32.totalorder %s33, 0
    %s36 = sadd.s32 %s35, 1
    %s37 = scalar_select %p34, %s35, %s36
    %p40 = pneg %p34
    %p41 = scmp.eq.s32.totalorder %s11, 1
    %p42 = por %p40, %p41
    %p43 = scmp.ne.s32.totalorder %s35, %s38
    %p44 = scmp.eq.s32.totalorder %s11, 0
    %p45 = por %p43, %p44
    %p46 = scmp.ne.s32.totalorder %s35, %s38
    %p47 = scmp.eq.s32.totalorder %s16, 1
    %p48 = por %p46, %p47
    %p49 = scmp.ne.s32.totalorder %s38, %s39
    %p50 = scmp.eq.s32.totalorder %s16, 0
    %p51 = por %p49, %p50
    %p52 = scmp.ne.s32.totalorder %s38, %s39
    %p53 = scmp.eq.s32.totalorder %s17, 1
    %p54 = por %p52, %p53
    %p56 = scmp.ne.s32.totalorder %s39, %s55
    %p57 = scmp.eq.s32.totalorder %s17, 0
    %p58 = por %p56, %p57
    %s60 = sadd.s32 %s59, 1
    %p63 = scmp.eq.s32.totalorder %s11, 1
    %p64 = scmp.ne.s32.totalorder %s59, %s61
    %p65 = scmp.eq.s32.totalorder %s11, 0
    %p66 = por %p64, %p65
    %p67 = scmp.ne.s32.totalorder %s59, %s61
    %p68 = scmp.eq.s32.totalorder %s16, 1
    %p69 = por %p67, %p68
    %p70 = scmp.ne.s32.totalorder %s61, %s62
    %p71 = scmp.eq.s32.totalorder %s16, 0
    %p72 = por %p70, %p71
    %p73 = scmp.ne.s32.totalorder %s61, %s62
    %p74 = scmp.eq.s32.totalorder %s17, 1
    %p75 = por %p73, %p74
    %p77 = scmp.ne.s32.totalorder %s62, %s76
    %p78 = scmp.eq.s32.totalorder %s17, 0
    %p79 = por %p77, %p78
    %s81 = sadd.s32 %s80, 1
    %p84 = scmp.eq.s32.totalorder %s11, 1
    %p85 = scmp.ne.s32.totalorder %s80, %s82
    %p86 = scmp.eq.s32.totalorder %s11, 0
    %p87 = por %p85, %p86
    %p88 = scmp.ne.s32.totalorder %s80, %s82
    %p89 = scmp.eq.s32.totalorder %s16, 1
    %p90 = por %p88, %p89
    %p91 = scmp.ne.s32.totalorder %s82, %s83
    %p92 = scmp.eq.s32.totalorder %s16, 0
    %p93 = por %p91, %p92
    %p94 = scmp.ne.s32.totalorder %s82, %s83
    %p95 = scmp.eq.s32.totalorder %s17, 1
    %p96 = por %p94, %p95
    %p98 = scmp.ne.s32.totalorder %s83, %s97
    %p99 = scmp.eq.s32.totalorder %s17, 0
    %p100 = por %p98, %p99
    %s102 = sadd.s32 %s101, 1
    %p105 = scmp.eq.s32.totalorder %s11, 1
    %p106 = scmp.ne.s32.totalorder %s101, %s103
    %p107 = scmp.eq.s32.totalorder %s11, 0
    %p108 = por %p106, %p107
    %p109 = scmp.ne.s32.totalorder %s101, %s103
    %p110 = scmp.eq.s32.totalorder %s16, 1
    %p111 = por %p109, %p110
    %p112 = scmp.ne.s32.totalorder %s103, %s104
    %p113 = scmp.eq.s32.totalorder %s16, 0
    %p114 = por %p112, %p113
    %p115 = scmp.ne.s32.totalorder %s103, %s104
    %p116 = scmp.eq.s32.totalorder %s17, 1
    %p117 = por %p115, %p116
    %p119 = scmp.ne.s32.totalorder %s104, %s118
    %p120 = scmp.eq.s32.totalorder %s17, 0
    %p121 = por %p119, %p120
    %s123 = sadd.s32 %s122, 1
    %p126 = scmp.eq.s32.totalorder %s11, 1
    %p127 = scmp.ne.s32.totalorder %s122, %s124
    %p128 = scmp.eq.s32.totalorder %s11, 0
    %p129 = por %p127, %p128
    %p130 = scmp.ne.s32.totalorder %s122, %s124
    %p131 = scmp.eq.s32.totalorder %s16, 1
    %p132 = por %p130, %p131
    %p133 = scmp.ne.s32.totalorder %s124, %s125
    %p134 = scmp.eq.s32.totalorder %s16, 0
    %p135 = por %p133, %p134
    %p136 = scmp.ne.s32.totalorder %s124, %s125
    %p137 = scmp.eq.s32.totalorder %s17, 1
    %p138 = por %p136, %p137
    %p140 = scmp.ne.s32.totalorder %s125, %s139
    %p141 = scmp.eq.s32.totalorder %s17, 0
    %p142 = por %p140, %p141
    %s143 = ssub.s32 %s18, %s30
    %s144 = ssub.s32 %s19, %s26
    %s145 = sor.u32 %s143, %s144
    %p146 = scmp.eq.s32.totalorder %s145, 0
    %s148 = sadd.s32 %s147, 1
    %s149 = scalar_select %p146, %s147, %s148
    %p152 = pneg %p146
    %p153 = scmp.eq.s32.totalorder %s11, 1
    %p154 = por %p152, %p153
    %p155 = scmp.ne.s32.totalorder %s147, %s150
    %p156 = scmp.eq.s32.totalorder %s11, 0
    %p157 = por %p155, %p156
    %p158 = scmp.ne.s32.totalorder %s147, %s150
    %p159 = scmp.eq.s32.totalorder %s16, 1
    %p160 = por %p158, %p159
    %p161 = scmp.ne.s32.totalorder %s150, %s151
    %p162 = scmp.eq.s32.totalorder %s16, 0
    %p163 = por %p161, %p162
    %p164 = scmp.ne.s32.totalorder %s150, %s151
    %p165 = scmp.eq.s32.totalorder %s17, 1
    %p166 = por %p164, %p165
    %p168 = scmp.ne.s32.totalorder %s151, %s167
    %p169 = scmp.eq.s32.totalorder %s17, 0
    %p170 = por %p168, %p169
    %p171 = scmp.le.s32.totalorder 1, %s11
    %p172 = scmp.lt.s32.totalorder %s11, 3
    %p173 = pnand %p171, %p172
    %p174 = pneg %p173
    // Predicated region
    $region9: #{tpu_custom_call.1} parent=5 // pred_check
      _
    $region10: #{tpu_custom_call.1} parent=5 // pred_check_branch
      %176 = sbr.rel (%p173) target = $region12
    $region11: #{tpu_custom_call.1} parent=5 // pred_region
      %s177 = ssub.s32 %s11, 1
      // Predicated region
      $region13: #{tpu_custom_call.1} parent=11 // pred_check
        %p178 = pneg %p72
      $region14: #{tpu_custom_call.1} parent=11 // pred_check_branch
        %180 = sbr.rel (%p178) target = $region16
      $region15: #{tpu_custom_call.1} parent=11 // pred_region
        _
      $region16: #{tpu_custom_call.1} parent=11 // pred_fallthru
        _
      // Predicated region
      $region17: #{tpu_custom_call.1} parent=11 // pred_check
        %p181 = pneg %p93
      $region18: #{tpu_custom_call.1} parent=11 // pred_check_branch
        %183 = sbr.rel (%p181) target = $region20
      $region19: #{tpu_custom_call.1} parent=11 // pred_region
        _
      $region20: #{tpu_custom_call.1} parent=11 // pred_fallthru
        _
      // Predicated region
      $region21: #{tpu_custom_call.1} parent=11 // pred_check
        %p184 = pneg %p114
      $region22: #{tpu_custom_call.1} parent=11 // pred_check_branch
        %186 = sbr.rel (%p184) target = $region24
      $region23: #{tpu_custom_call.1} parent=11 // pred_region
        _
      $region24: #{tpu_custom_call.1} parent=11 // pred_fallthru
        _
      // Predicated region
      $region25: #{tpu_custom_call.1} parent=11 // pred_check
        %p187 = pneg %p135
      $region26: #{tpu_custom_call.1} parent=11 // pred_check_branch
        %189 = sbr.rel (%p187) target = $region28
      $region27: #{tpu_custom_call.1} parent=11 // pred_region
        _
      $region28: #{tpu_custom_call.1} parent=11 // pred_fallthru
        _
    $region12: #{tpu_custom_call.1} parent=5 // pred_fallthru
      _
    %p190 = scmp.lt.s32.totalorder %s11, 2
    // Predicated region
    $region29: #{tpu_custom_call.1} parent=5 // pred_check
      %p191 = pneg %p190
    $region30: #{tpu_custom_call.1} parent=5 // pred_check_branch
      %193 = sbr.rel (%p191) target = $region32
    $region31: #{tpu_custom_call.1} parent=5 // pred_region
      // Predicated region
      $region33: #{tpu_custom_call.1} parent=31 // pred_check
        %p194 = pneg %p45
      $region34: #{tpu_custom_call.1} parent=31 // pred_check_branch
        %196 = sbr.rel (%p194) target = $region36
      $region35: #{tpu_custom_call.1} parent=31 // pred_region
        %s197 = smul.u32 8, %s19
        %p198 = scmp.lt.s32.totalorder %s18, 1
        %s199 = scalar_select %p198, %s18, 1
        %p200 = scmp.lt.s32.totalorder %s197, 7
        %s201 = scalar_select %p200, %s197, 7
        %s202 = smul.addr %s199, 64
        %s203 = sadd.s32 %s201, %s202
        %s204 = smul.addr %s203, 4
        %s205 = scalar_lea.vmem %s0, %s204
        %s206 = smul.u32 8, %s19
      $region36: #{tpu_custom_call.1} parent=31 // pred_fallthru
        _
    $region32: #{tpu_custom_call.1} parent=5 // pred_fallthru
      _
    %p207 = scmp.le.s32.totalorder 1, %s11
    %p208 = scmp.lt.s32.totalorder %s11, 3
    %p209 = pnand %p207, %p208
    %p210 = pneg %p209
    // Predicated region
    $region37: #{tpu_custom_call.1} parent=5 // pred_check
      _
    $region38: #{tpu_custom_call.1} parent=5 // pred_check_branch
      %212 = sbr.rel (%p209) target = $region40
    $region39: #{tpu_custom_call.1} parent=5 // pred_region
      %s213 = ssub.s32 %s11, 1
      %s214 = smul.u32 8, %s21
      %p215 = scmp.lt.s32.totalorder %s20, 1
      %s216 = scalar_select %p215, %s20, 1
      %p217 = scmp.lt.s32.totalorder %s214, 7
      %s218 = scalar_select %p217, %s214, 7
      %s219 = smul.addr %s216, 64
      %s220 = sadd.s32 %s218, %s219
      %s221 = smul.addr %s220, 4
      %s222 = scalar_lea.vmem %s0, %s221
      %p223 = pneg %p51
      %p224 = pneg %p48
      %p225 = pneg %p72
      %p226 = pneg %p69
      %p227 = pneg %p93
      %p228 = pneg %p90
      %p229 = pneg %p114
      %p230 = pneg %p111
      %p231 = pneg %p135
      %p232 = pneg %p132
      %p233 = pneg %p163
      %p234 = pneg %p160
      %s235 = smul.u32 8, %s21
      %p236 = scmp.lt.s32.totalorder %s20, 1
      %s237 = scalar_select %p236, %s20, 1
      %p238 = scmp.lt.s32.totalorder %s235, 7
      %s239 = scalar_select %p238, %s235, 7
      %s240 = smul.addr %s237, 32
      %s241 = sadd.s32 %s239, %s240
      %s242 = smul.addr %s241, 8
      %s243 = scalar_lea.vmem %s5, %s242
      %s244 = smul.u32 8, %s21
      %p245 = scmp.lt.s32.totalorder %s20, 1
      %s246 = scalar_select %p245, %s20, 1
      %p247 = scmp.lt.s32.totalorder %s244, 7
      %s248 = scalar_select %p247, %s244, 7
      %s249 = smul.addr %s246, 64
      %s250 = sadd.s32 %s248, %s249
      %s251 = smul.addr %s250, 4
      %s252 = scalar_lea.vmem %s0, %s251
      %s253 = smul.u32 8, %s21
      %s254 = smul.u32 8, %s21
      %p255 = scmp.lt.s32.totalorder %s20, 1
      %s256 = scalar_select %p255, %s20, 1
      %p257 = scmp.lt.s32.totalorder %s254, 7
      %s258 = scalar_select %p257, %s254, 7
      %s259 = smul.addr %s256, 32
      %s260 = sadd.s32 %s258, %s259
      %s261 = smul.addr %s260, 8
      %s262 = scalar_lea.vmem %s5, %s261
      %s263 = smul.u32 8, %s21
      %v265 = vld [vmem:[%s1] sm:$0x3]
      %s266 = scalar_lea.vmem %s1, 2
      %v267 = vld [vmem:[%s266] sm:$0x3]
      %s268 = scalar_lea.vmem %s1, 4
      %v269 = vld [vmem:[%s268] sm:$0x3]
      %v270 = vld [vmem:[%s3] sm:$0xf]
      %v271 = vld [vmem:[%s3 + $0x4] sm:$0xf]
      %s272 = scalar_lea.vmem %s3, 8
      %v273 = vld [vmem:[%s272] sm:$0xf]
      %v274 = vld [vmem:[%s272 + $0x4] sm:$0xf]
      %s275 = scalar_lea.vmem %s3, 16
      %v276 = vld [vmem:[%s275] sm:$0xf]
      %v277 = vld [vmem:[%s275 + $0x4] sm:$0xf]
      %v278 = vld [vmem:[%s2] sm:$0x1]
      %v279 = vld [vmem:[%s4] sm:$0x1]
      %v280 = vlaneseq
      %v281 = vand.u32 %v280, 127
      %vm282 = vcmp.lt.s32.totalorder %v281, 8
      %v283 = vld [vmem:[%s252] sm:$0xf]
      %v284 = vld [vmem:[%s252 + $0x4] sm:$0xf]
      %v285 = vld [vmem:[%s252 + $0x8] sm:$0xf]
      %v286 = vld [vmem:[%s252 + $0xc] sm:$0xf]
      %v287 = vld [vmem:[%s252 + $0x10] sm:$0xf]
      %v288 = vld [vmem:[%s252 + $0x14] sm:$0xf]
      %v289 = vld [vmem:[%s252 + $0x18] sm:$0xf]
      %v290 = vld [vmem:[%s252 + $0x1c] sm:$0xf]
      %v299 = vunpack.c.l.b16 %v283
      %v300 = vunpack.c.l.b16 %v284
      %v301 = vunpack.c.l.b16 %v285
      %v302 = vunpack.c.l.b16 %v286
      %v303 = vunpack.c.l.b16 %v287
      %v304 = vunpack.c.l.b16 %v288
      %v305 = vunpack.c.l.b16 %v289
      %v306 = vunpack.c.l.b16 %v290
      %v307 = vpack.c.b16 %v300, %v299
      %v308 = vpack.c.b16 %v302, %v301
      %v309 = vpack.c.b16 %v304, %v303
      %v310 = vpack.c.b16 %v306, %v305
      %vm311 = vcmask 31744
      %v313 = vsel %vm311, %v307, 0
      %v316 = vsel %vm311, %v308, 0
      %v319 = vsel %vm311, %v309, 0
      %v322 = vsel %vm311, %v310, 0
      %vm324 = vcmask 1041408
      %v326 = vsel %vm324, %v267, 0
      %328 = vmatpush.bf16.msra.mxu0 0
      %329 = vmatpush.bf16.msra.mxu0 0
      %330 = vmatpush.bf16.msra.mxu0 0
      %331 = vmatpush.bf16.msra.mxu0 0
      %332 = vmatpush.bf16.msra.mxu0 0
      %333 = vmatpush.bf16.msra.mxu0 0
      %334 = vmatpush.bf16.msra.mxu0 0
      %335 = vmatpush.bf16.msra.mxu0 %v326
      %336 = vmatmul.bf16.gmra.mxu0 %v313
      %v337 = vpop.f32.mrf.mxu0
      %v338 = vadd.f32 0.0, %v337
      %v339 = vpop.f32.mrf.mxu0
      %v340 = vadd.f32 0.0, %v339
      %341 = vmatmul.bf16.gmra.mxu0 %v316
      %v342 = vpop.f32.mrf.mxu0
      %v343 = vadd.f32 0.0, %v342
      %v344 = vpop.f32.mrf.mxu0
      %v345 = vadd.f32 0.0, %v344
      %346 = vmatmul.bf16.gmra.mxu0 %v319
      %v347 = vpop.f32.mrf.mxu0
      %v348 = vadd.f32 0.0, %v347
      %v349 = vpop.f32.mrf.mxu0
      %v350 = vadd.f32 0.0, %v349
      %351 = vmatmul.bf16.gmra.mxu0 %v322
      %v352 = vpop.f32.mrf.mxu0
      %v353 = vadd.f32 0.0, %v352
      %v354 = vpop.f32.mrf.mxu0
      %v355 = vadd.f32 0.0, %v354
      %356 = vdwg.mxu0
      %v358 = vperm.slane %v278, 0
      %v360 = vadd.f32 %v358, %v338
      %v361 = vadd.f32 %v358, %v340
      %v362 = vadd.f32 %v358, %v343
      %v363 = vadd.f32 %v358, %v345
      %v364 = vadd.f32 %v358, %v348
      %v365 = vadd.f32 %v358, %v350
      %v366 = vadd.f32 %v358, %v353
      %v367 = vadd.f32 %v358, %v355
      %s368 = scalar_lea.vmem %s252, 32
      %v369 = vld [vmem:[%s368] sm:$0xf]
      %v370 = vld [vmem:[%s368 + $0x4] sm:$0xf]
      %v371 = vld [vmem:[%s368 + $0x8] sm:$0xf]
      %v372 = vld [vmem:[%s368 + $0xc] sm:$0xf]
      %v373 = vld [vmem:[%s368 + $0x10] sm:$0xf]
      %v374 = vld [vmem:[%s368 + $0x14] sm:$0xf]
      %v375 = vld [vmem:[%s368 + $0x18] sm:$0xf]
      %v376 = vld [vmem:[%s368 + $0x1c] sm:$0xf]
      %v385 = vunpack.c.l.b16 %v369
      %v386 = vunpack.c.l.b16 %v370
      %v387 = vunpack.c.l.b16 %v371
      %v388 = vunpack.c.l.b16 %v372
      %v389 = vunpack.c.l.b16 %v373
      %v390 = vunpack.c.l.b16 %v374
      %v391 = vunpack.c.l.b16 %v375
      %v392 = vunpack.c.l.b16 %v376
      %v393 = vpack.c.b16 %v386, %v385
      %v394 = vpack.c.b16 %v388, %v387
      %v395 = vpack.c.b16 %v390, %v389
      %v396 = vpack.c.b16 %v392, %v391
      %v398 = vsel %vm311, %v393, 0
      %v401 = vsel %vm311, %v394, 0
      %v404 = vsel %vm311, %v395, 0
      %v407 = vsel %vm311, %v396, 0
      %v410 = vsel %vm324, %v269, 0
      %412 = vmatpush.bf16.msra.mxu0 0
      %413 = vmatpush.bf16.msra.mxu0 0
      %414 = vmatpush.bf16.msra.mxu0 0
      %415 = vmatpush.bf16.msra.mxu0 0
      %416 = vmatpush.bf16.msra.mxu0 0
      %417 = vmatpush.bf16.msra.mxu0 0
      %418 = vmatpush.bf16.msra.mxu0 0
      %419 = vmatpush.bf16.msra.mxu0 %v410
      %420 = vmatmul.bf16.gmra.mxu0 %v398
      %v421 = vpop.f32.mrf.mxu0
      %v422 = vadd.f32 0.0, %v421
      %v423 = vpop.f32.mrf.mxu0
      %v424 = vadd.f32 0.0, %v423
      %425 = vmatmul.bf16.gmra.mxu0 %v401
      %v426 = vpop.f32.mrf.mxu0
      %v427 = vadd.f32 0.0, %v426
      %v428 = vpop.f32.mrf.mxu0
      %v429 = vadd.f32 0.0, %v428
      %430 = vmatmul.bf16.gmra.mxu0 %v404
      %v431 = vpop.f32.mrf.mxu0
      %v432 = vadd.f32 0.0, %v431
      %v433 = vpop.f32.mrf.mxu0
      %v434 = vadd.f32 0.0, %v433
      %435 = vmatmul.bf16.gmra.mxu0 %v407
      %v436 = vpop.f32.mrf.mxu0
      %v437 = vadd.f32 0.0, %v436
      %v438 = vpop.f32.mrf.mxu0
      %v439 = vadd.f32 0.0, %v438
      %440 = vdwg.mxu0
      %v441 = vadd.f32 %v360, %v422
      %v442 = vadd.f32 %v361, %v424
      %v443 = vadd.f32 %v362, %v427
      %v444 = vadd.f32 %v363, %v429
      %v445 = vadd.f32 %v364, %v432
      %v446 = vadd.f32 %v365, %v434
      %v447 = vadd.f32 %v366, %v437
      %v448 = vadd.f32 %v367, %v439
      %v449 = vmax.f32 %v441, 0.0
      %v450 = vmax.f32 %v442, 0.0
      %v451 = vmax.f32 %v443, 0.0
      %v452 = vmax.f32 %v444, 0.0
      %v453 = vmax.f32 %v445, 0.0
      %v454 = vmax.f32 %v446, 0.0
      %v455 = vmax.f32 %v447, 0.0
      %v456 = vmax.f32 %v448, 0.0
      %v457 = vsel %vm282, %v449, %v441
      %v458 = vsel %vm282, %v450, %v442
      %v459 = vsel %vm282, %v451, %v443
      %v460 = vsel %vm282, %v452, %v444
      %v461 = vsel %vm282, %v453, %v445
      %v462 = vsel %vm282, %v454, %v446
      %v463 = vsel %vm282, %v455, %v447
      %v464 = vsel %vm282, %v456, %v448
      %v465 = vpack.c.bf16 %v457, %v457
      %v466 = vpack.c.bf16 %v458, %v458
      %v467 = vpack.c.bf16 %v459, %v459
      %v468 = vpack.c.bf16 %v460, %v460
      %v469 = vpack.c.bf16 %v461, %v461
      %v470 = vpack.c.bf16 %v462, %v462
      %v471 = vpack.c.bf16 %v463, %v463
      %v472 = vpack.c.bf16 %v464, %v464
      %vm473 = vcmask 125952
      %474 = vst.msk [vmem:[#allocation2] sm:$0xf] %vm473, %v465
      %475 = vst.msk [vmem:[#allocation2 + $0x4] sm:$0xf] %vm473, %v466
      %476 = vst.msk [vmem:[#allocation2 + $0x8] sm:$0xf] %vm473, %v467
      %477 = vst.msk [vmem:[#allocation2 + $0xc] sm:$0xf] %vm473, %v468
      %478 = vst.msk [vmem:[#allocation2 + $0x10] sm:$0xf] %vm473, %v469
      %479 = vst.msk [vmem:[#allocation2 + $0x14] sm:$0xf] %vm473, %v470
      %480 = vst.msk [vmem:[#allocation2 + $0x18] sm:$0xf] %vm473, %v471
      %481 = vst.msk [vmem:[#allocation2 + $0x1c] sm:$0xf] %vm473, %v472
      %v482 = vld [vmem:[%s368] sm:$0xf]
      %v483 = vld [vmem:[%s368 + $0x4] sm:$0xf]
      %v484 = vld [vmem:[%s368 + $0x8] sm:$0xf]
      %v485 = vld [vmem:[%s368 + $0xc] sm:$0xf]
      %v486 = vld [vmem:[%s368 + $0x10] sm:$0xf]
      %v487 = vld [vmem:[%s368 + $0x14] sm:$0xf]
      %v488 = vld [vmem:[%s368 + $0x18] sm:$0xf]
      %v489 = vld [vmem:[%s368 + $0x1c] sm:$0xf]
      %v498 = vunpack.c.l.b16 %v482
      %v499 = vunpack.c.l.b16 %v483
      %v500 = vunpack.c.l.b16 %v484
      %v501 = vunpack.c.l.b16 %v485
      %v502 = vunpack.c.l.b16 %v486
      %v503 = vunpack.c.l.b16 %v487
      %v504 = vunpack.c.l.b16 %v488
      %v505 = vunpack.c.l.b16 %v489
      %v506 = vpack.c.b16 %v499, %v498
      %v507 = vpack.c.b16 %v501, %v500
      %v508 = vpack.c.b16 %v503, %v502
      %v509 = vpack.c.b16 %v505, %v504
      %v511 = vsel %vm311, %v506, 0
      %v514 = vsel %vm311, %v507, 0
      %v517 = vsel %vm311, %v508, 0
      %v520 = vsel %vm311, %v509, 0
      %v523 = vsel %vm324, %v265, 0
      %525 = vmatpush.bf16.msra.mxu0 0
      %526 = vmatpush.bf16.msra.mxu0 0
      %527 = vmatpush.bf16.msra.mxu0 0
      %528 = vmatpush.bf16.msra.mxu0 0
      %529 = vmatpush.bf16.msra.mxu0 0
      %530 = vmatpush.bf16.msra.mxu0 0
      %531 = vmatpush.bf16.msra.mxu0 0
      %532 = vmatpush.bf16.msra.mxu0 %v523
      %533 = vmatmul.bf16.gmra.mxu0 %v511
      %v534 = vpop.f32.mrf.mxu0
      %v535 = vadd.f32 0.0, %v534
      %v536 = vpop.f32.mrf.mxu0
      %v537 = vadd.f32 0.0, %v536
      %538 = vmatmul.bf16.gmra.mxu0 %v514
      %v539 = vpop.f32.mrf.mxu0
      %v540 = vadd.f32 0.0, %v539
      %v541 = vpop.f32.mrf.mxu0
      %v542 = vadd.f32 0.0, %v541
      %543 = vmatmul.bf16.gmra.mxu0 %v517
      %v544 = vpop.f32.mrf.mxu0
      %v545 = vadd.f32 0.0, %v544
      %v546 = vpop.f32.mrf.mxu0
      %v547 = vadd.f32 0.0, %v546
      %548 = vmatmul.bf16.gmra.mxu0 %v520
      %v549 = vpop.f32.mrf.mxu0
      %v550 = vadd.f32 0.0, %v549
      %v551 = vpop.f32.mrf.mxu0
      %v552 = vadd.f32 0.0, %v551
      %553 = vdwg.mxu0
      %v554 = vadd.f32 %v358, %v535
      %v555 = vadd.f32 %v358, %v537
      %v556 = vadd.f32 %v358, %v540
      %v557 = vadd.f32 %v358, %v542
      %v558 = vadd.f32 %v358, %v545
      %v559 = vadd.f32 %v358, %v547
      %v560 = vadd.f32 %v358, %v550
      %v561 = vadd.f32 %v358, %v552
      %s562 = scalar_lea.vmem %s252, 64
      %v563 = vld [vmem:[%s562] sm:$0xf]
      %v564 = vld [vmem:[%s562 + $0x4] sm:$0xf]
      %v565 = vld [vmem:[%s562 + $0x8] sm:$0xf]
      %v566 = vld [vmem:[%s562 + $0xc] sm:$0xf]
      %v567 = vld [vmem:[%s562 + $0x10] sm:$0xf]
      %v568 = vld [vmem:[%s562 + $0x14] sm:$0xf]
      %v569 = vld [vmem:[%s562 + $0x18] sm:$0xf]
      %v570 = vld [vmem:[%s562 + $0x1c] sm:$0xf]
      %v579 = vunpack.c.l.b16 %v563
      %v580 = vunpack.c.l.b16 %v564
      %v581 = vunpack.c.l.b16 %v565
      %v582 = vunpack.c.l.b16 %v566
      %v583 = vunpack.c.l.b16 %v567
      %v584 = vunpack.c.l.b16 %v568
      %v585 = vunpack.c.l.b16 %v569
      %v586 = vunpack.c.l.b16 %v570
      %v587 = vpack.c.b16 %v580, %v579
      %v588 = vpack.c.b16 %v582, %v581
      %v589 = vpack.c.b16 %v584, %v583
      %v590 = vpack.c.b16 %v586, %v585
      %v592 = vsel %vm311, %v587, 0
      %v595 = vsel %vm311, %v588, 0
      %v598 = vsel %vm311, %v589, 0
      %v601 = vsel %vm311, %v590, 0
      %603 = vmatpush.bf16.msra.mxu0 0
      %604 = vmatpush.bf16.msra.mxu0 0
      %605 = vmatpush.bf16.msra.mxu0 0
      %606 = vmatpush.bf16.msra.mxu0 0
      %607 = vmatpush.bf16.msra.mxu0 0
      %608 = vmatpush.bf16.msra.mxu0 0
      %609 = vmatpush.bf16.msra.mxu0 0
      %610 = vmatpush.bf16.msra.mxu0 %v326
      %611 = vmatmul.bf16.gmra.mxu0 %v592
      %v612 = vpop.f32.mrf.mxu0
      %v613 = vadd.f32 0.0, %v612
      %v614 = vpop.f32.mrf.mxu0
      %v615 = vadd.f32 0.0, %v614
      %616 = vmatmul.bf16.gmra.mxu0 %v595
      %v617 = vpop.f32.mrf.mxu0
      %v618 = vadd.f32 0.0, %v617
      %v619 = vpop.f32.mrf.mxu0
      %v620 = vadd.f32 0.0, %v619
      %621 = vmatmul.bf16.gmra.mxu0 %v598
      %v622 = vpop.f32.mrf.mxu0
      %v623 = vadd.f32 0.0, %v622
      %v624 = vpop.f32.mrf.mxu0
      %v625 = vadd.f32 0.0, %v624
      %626 = vmatmul.bf16.gmra.mxu0 %v601
      %v627 = vpop.f32.mrf.mxu0
      %v628 = vadd.f32 0.0, %v627
      %v629 = vpop.f32.mrf.mxu0
      %v630 = vadd.f32 0.0, %v629
      %631 = vdwg.mxu0
      %v632 = vadd.f32 %v554, %v613
      %v633 = vadd.f32 %v555, %v615
      %v634 = vadd.f32 %v556, %v618
      %v635 = vadd.f32 %v557, %v620
      %v636 = vadd.f32 %v558, %v623
      %v637 = vadd.f32 %v559, %v625
      %v638 = vadd.f32 %v560, %v628
      %v639 = vadd.f32 %v561, %v630
      %s640 = scalar_lea.vmem %s252, 96
      %v641 = vld [vmem:[%s640] sm:$0xf]
      %v642 = vld [vmem:[%s640 + $0x4] sm:$0xf]
      %v643 = vld [vmem:[%s640 + $0x8] sm:$0xf]
      %v644 = vld [vmem:[%s640 + $0xc] sm:$0xf]
      %v645 = vld [vmem:[%s640 + $0x10] sm:$0xf]
      %v646 = vld [vmem:[%s640 + $0x14] sm:$0xf]
      %v647 = vld [vmem:[%s640 + $0x18] sm:$0xf]
      %v648 = vld [vmem:[%s640 + $0x1c] sm:$0xf]
      %v657 = vunpack.c.l.b16 %v641
      %v658 = vunpack.c.l.b16 %v642
      %v659 = vunpack.c.l.b16 %v643
      %v660 = vunpack.c.l.b16 %v644
      %v661 = vunpack.c.l.b16 %v645
      %v662 = vunpack.c.l.b16 %v646
      %v663 = vunpack.c.l.b16 %v647
      %v664 = vunpack.c.l.b16 %v648
      %v665 = vpack.c.b16 %v658, %v657
      %v666 = vpack.c.b16 %v660, %v659
      %v667 = vpack.c.b16 %v662, %v661
      %v668 = vpack.c.b16 %v664, %v663
      %v670 = vsel %vm311, %v665, 0
      %v673 = vsel %vm311, %v666, 0
      %v676 = vsel %vm311, %v667, 0
      %v679 = vsel %vm311, %v668, 0
      %681 = vmatpush.bf16.msra.mxu0 0
      %682 = vmatpush.bf16.msra.mxu0 0
      %683 = vmatpush.bf16.msra.mxu0 0
      %684 = vmatpush.bf16.msra.mxu0 0
      %685 = vmatpush.bf16.msra.mxu0 0
      %686 = vmatpush.bf16.msra.mxu0 0
      %687 = vmatpush.bf16.msra.mxu0 0
      %688 = vmatpush.bf16.msra.mxu0 %v410
      %689 = vmatmul.bf16.gmra.mxu0 %v670
      %v690 = vpop.f32.mrf.mxu0
      %v691 = vadd.f32 0.0, %v690
      %v692 = vpop.f32.mrf.mxu0
      %v693 = vadd.f32 0.0, %v692
      %694 = vmatmul.bf16.gmra.mxu0 %v673
      %v695 = vpop.f32.mrf.mxu0
      %v696 = vadd.f32 0.0, %v695
      %v697 = vpop.f32.mrf.mxu0
      %v698 = vadd.f32 0.0, %v697
      %699 = vmatmul.bf16.gmra.mxu0 %v676
      %v700 = vpop.f32.mrf.mxu0
      %v701 = vadd.f32 0.0, %v700
      %v702 = vpop.f32.mrf.mxu0
      %v703 = vadd.f32 0.0, %v702
      %704 = vmatmul.bf16.gmra.mxu0 %v679
      %v705 = vpop.f32.mrf.mxu0
      %v706 = vadd.f32 0.0, %v705
      %v707 = vpop.f32.mrf.mxu0
      %v708 = vadd.f32 0.0, %v707
      %709 = vdwg.mxu0
      %v710 = vadd.f32 %v632, %v691
      %v711 = vadd.f32 %v633, %v693
      %v712 = vadd.f32 %v634, %v696
      %v713 = vadd.f32 %v635, %v698
      %v714 = vadd.f32 %v636, %v701
      %v715 = vadd.f32 %v637, %v703
      %v716 = vadd.f32 %v638, %v706
      %v717 = vadd.f32 %v639, %v708
      %v718 = vmax.f32 %v710, 0.0
      %v719 = vmax.f32 %v711, 0.0
      %v720 = vmax.f32 %v712, 0.0
      %v721 = vmax.f32 %v713, 0.0
      %v722 = vmax.f32 %v714, 0.0
      %v723 = vmax.f32 %v715, 0.0
      %v724 = vmax.f32 %v716, 0.0
      %v725 = vmax.f32 %v717, 0.0
      %v726 = vsel %vm282, %v718, %v710
      %v727 = vsel %vm282, %v719, %v711
      %v728 = vsel %vm282, %v720, %v712
      %v729 = vsel %vm282, %v721, %v713
      %v730 = vsel %vm282, %v722, %v714
      %v731 = vsel %vm282, %v723, %v715
      %v732 = vsel %vm282, %v724, %v716
      %v733 = vsel %vm282, %v725, %v717
      %v734 = vpack.c.bf16 %v726, %v726
      %v735 = vpack.c.bf16 %v727, %v727
      %v736 = vpack.c.bf16 %v728, %v728
      %v737 = vpack.c.bf16 %v729, %v729
      %v738 = vpack.c.bf16 %v730, %v730
      %v739 = vpack.c.bf16 %v731, %v731
      %v740 = vpack.c.bf16 %v732, %v732
      %v741 = vpack.c.bf16 %v733, %v733
      %s742 = scalar_lea.vmem [#allocation2], 32
      %743 = vst.msk [vmem:[%s742] sm:$0xf] %vm473, %v734
      %744 = vst.msk [vmem:[%s742 + $0x4] sm:$0xf] %vm473, %v735
      %745 = vst.msk [vmem:[%s742 + $0x8] sm:$0xf] %vm473, %v736
      %746 = vst.msk [vmem:[%s742 + $0xc] sm:$0xf] %vm473, %v737
      %747 = vst.msk [vmem:[%s742 + $0x10] sm:$0xf] %vm473, %v738
      %748 = vst.msk [vmem:[%s742 + $0x14] sm:$0xf] %vm473, %v739
      %749 = vst.msk [vmem:[%s742 + $0x18] sm:$0xf] %vm473, %v740
      %750 = vst.msk [vmem:[%s742 + $0x1c] sm:$0xf] %vm473, %v741
      %v751 = vld [vmem:[%s640] sm:$0xf]
      %v752 = vld [vmem:[%s640 + $0x4] sm:$0xf]
      %v753 = vld [vmem:[%s640 + $0x8] sm:$0xf]
      %v754 = vld [vmem:[%s640 + $0xc] sm:$0xf]
      %v755 = vld [vmem:[%s640 + $0x10] sm:$0xf]
      %v756 = vld [vmem:[%s640 + $0x14] sm:$0xf]
      %v757 = vld [vmem:[%s640 + $0x18] sm:$0xf]
      %v758 = vld [vmem:[%s640 + $0x1c] sm:$0xf]
      %v767 = vunpack.c.l.b16 %v751
      %v768 = vunpack.c.l.b16 %v752
      %v769 = vunpack.c.l.b16 %v753
      %v770 = vunpack.c.l.b16 %v754
      %v771 = vunpack.c.l.b16 %v755
      %v772 = vunpack.c.l.b16 %v756
      %v773 = vunpack.c.l.b16 %v757
      %v774 = vunpack.c.l.b16 %v758
      %v775 = vpack.c.b16 %v768, %v767
      %v776 = vpack.c.b16 %v770, %v769
      %v777 = vpack.c.b16 %v772, %v771
      %v778 = vpack.c.b16 %v774, %v773
      %v780 = vsel %vm311, %v775, 0
      %v783 = vsel %vm311, %v776, 0
      %v786 = vsel %vm311, %v777, 0
      %v789 = vsel %vm311, %v778, 0
      %791 = vmatpush.bf16.msra.mxu0 0
      %792 = vmatpush.bf16.msra.mxu0 0
      %793 = vmatpush.bf16.msra.mxu0 0
      %794 = vmatpush.bf16.msra.mxu0 0
      %795 = vmatpush.bf16.msra.mxu0 0
      %796 = vmatpush.bf16.msra.mxu0 0
      %797 = vmatpush.bf16.msra.mxu0 0
      %798 = vmatpush.bf16.msra.mxu0 %v523
      %799 = vmatmul.bf16.gmra.mxu0 %v780
      %v800 = vpop.f32.mrf.mxu0
      %v801 = vadd.f32 0.0, %v800
      %v802 = vpop.f32.mrf.mxu0
      %v803 = vadd.f32 0.0, %v802
      %804 = vmatmul.bf16.gmra.mxu0 %v783
      %v805 = vpop.f32.mrf.mxu0
      %v806 = vadd.f32 0.0, %v805
      %v807 = vpop.f32.mrf.mxu0
      %v808 = vadd.f32 0.0, %v807
      %809 = vmatmul.bf16.gmra.mxu0 %v786
      %v810 = vpop.f32.mrf.mxu0
      %v811 = vadd.f32 0.0, %v810
      %v812 = vpop.f32.mrf.mxu0
      %v813 = vadd.f32 0.0, %v812
      %814 = vmatmul.bf16.gmra.mxu0 %v789
      %v815 = vpop.f32.mrf.mxu0
      %v816 = vadd.f32 0.0, %v815
      %v817 = vpop.f32.mrf.mxu0
      %v818 = vadd.f32 0.0, %v817
      %819 = vdwg.mxu0
      %v820 = vadd.f32 %v358, %v801
      %v821 = vadd.f32 %v358, %v803
      %v822 = vadd.f32 %v358, %v806
      %v823 = vadd.f32 %v358, %v808
      %v824 = vadd.f32 %v358, %v811
      %v825 = vadd.f32 %v358, %v813
      %v826 = vadd.f32 %v358, %v816
      %v827 = vadd.f32 %v358, %v818
      %s828 = scalar_lea.vmem %s252, 128
      %v829 = vld [vmem:[%s828] sm:$0xf]
      %v830 = vld [vmem:[%s828 + $0x4] sm:$0xf]
      %v831 = vld [vmem:[%s828 + $0x8] sm:$0xf]
      %v832 = vld [vmem:[%s828 + $0xc] sm:$0xf]
      %v833 = vld [vmem:[%s828 + $0x10] sm:$0xf]
      %v834 = vld [vmem:[%s828 + $0x14] sm:$0xf]
      %v835 = vld [vmem:[%s828 + $0x18] sm:$0xf]
      %v836 = vld [vmem:[%s828 + $0x1c] sm:$0xf]
      %v845 = vunpack.c.l.b16 %v829
      %v846 = vunpack.c.l.b16 %v830
      %v847 = vunpack.c.l.b16 %v831
      %v848 = vunpack.c.l.b16 %v832
      %v849 = vunpack.c.l.b16 %v833
      %v850 = vunpack.c.l.b16 %v834
      %v851 = vunpack.c.l.b16 %v835
      %v852 = vunpack.c.l.b16 %v836
      %v853 = vpack.c.b16 %v846, %v845
      %v854 = vpack.c.b16 %v848, %v847
      %v855 = vpack.c.b16 %v850, %v849
      %v856 = vpack.c.b16 %v852, %v851
      %v858 = vsel %vm311, %v853, 0
      %v861 = vsel %vm311, %v854, 0
      %v864 = vsel %vm311, %v855, 0
      %v867 = vsel %vm311, %v856, 0
      %869 = vmatpush.bf16.msra.mxu0 0
      %870 = vmatpush.bf16.msra.mxu0 0
      %871 = vmatpush.bf16.msra.mxu0 0
      %872 = vmatpush.bf16.msra.mxu0 0
      %873 = vmatpush.bf16.msra.mxu0 0
      %874 = vmatpush.bf16.msra.mxu0 0
      %875 = vmatpush.bf16.msra.mxu0 0
      %876 = vmatpush.bf16.msra.mxu0 %v326
      %877 = vmatmul.bf16.gmra.mxu0 %v858
      %v878 = vpop.f32.mrf.mxu0
      %v879 = vadd.f32 0.0, %v878
      %v880 = vpop.f32.mrf.mxu0
      %v881 = vadd.f32 0.0, %v880
      %882 = vmatmul.bf16.gmra.mxu0 %v861
      %v883 = vpop.f32.mrf.mxu0
      %v884 = vadd.f32 0.0, %v883
      %v885 = vpop.f32.mrf.mxu0
      %v886 = vadd.f32 0.0, %v885
      %887 = vmatmul.bf16.gmra.mxu0 %v864
      %v888 = vpop.f32.mrf.mxu0
      %v889 = vadd.f32 0.0, %v888
      %v890 = vpop.f32.mrf.mxu0
      %v891 = vadd.f32 0.0, %v890
      %892 = vmatmul.bf16.gmra.mxu0 %v867
      %v893 = vpop.f32.mrf.mxu0
      %v894 = vadd.f32 0.0, %v893
      %v895 = vpop.f32.mrf.mxu0
      %v896 = vadd.f32 0.0, %v895
      %897 = vdwg.mxu0
      %v898 = vadd.f32 %v820, %v879
      %v899 = vadd.f32 %v821, %v881
      %v900 = vadd.f32 %v822, %v884
      %v901 = vadd.f32 %v823, %v886
      %v902 = vadd.f32 %v824, %v889
      %v903 = vadd.f32 %v825, %v891
      %v904 = vadd.f32 %v826, %v894
      %v905 = vadd.f32 %v827, %v896
      %s906 = scalar_lea.vmem %s252, 160
      %v907 = vld [vmem:[%s906] sm:$0xf]
      %v908 = vld [vmem:[%s906 + $0x4] sm:$0xf]
      %v909 = vld [vmem:[%s906 + $0x8] sm:$0xf]
      %v910 = vld [vmem:[%s906 + $0xc] sm:$0xf]
      %v911 = vld [vmem:[%s906 + $0x10] sm:$0xf]
      %v912 = vld [vmem:[%s906 + $0x14] sm:$0xf]
      %v913 = vld [vmem:[%s906 + $0x18] sm:$0xf]
      %v914 = vld [vmem:[%s906 + $0x1c] sm:$0xf]
      %v923 = vunpack.c.l.b16 %v907
      %v924 = vunpack.c.l.b16 %v908
      %v925 = vunpack.c.l.b16 %v909
      %v926 = vunpack.c.l.b16 %v910
      %v927 = vunpack.c.l.b16 %v911
      %v928 = vunpack.c.l.b16 %v912
      %v929 = vunpack.c.l.b16 %v913
      %v930 = vunpack.c.l.b16 %v914
      %v931 = vpack.c.b16 %v924, %v923
      %v932 = vpack.c.b16 %v926, %v925
      %v933 = vpack.c.b16 %v928, %v927
      %v934 = vpack.c.b16 %v930, %v929
      %v936 = vsel %vm311, %v931, 0
      %v939 = vsel %vm311, %v932, 0
      %v942 = vsel %vm311, %v933, 0
      %v945 = vsel %vm311, %v934, 0
      %947 = vmatpush.bf16.msra.mxu0 0
      %948 = vmatpush.bf16.msra.mxu0 0
      %949 = vmatpush.bf16.msra.mxu0 0
      %950 = vmatpush.bf16.msra.mxu0 0
      %951 = vmatpush.bf16.msra.mxu0 0
      %952 = vmatpush.bf16.msra.mxu0 0
      %953 = vmatpush.bf16.msra.mxu0 0
      %954 = vmatpush.bf16.msra.mxu0 %v410
      %955 = vmatmul.bf16.gmra.mxu0 %v936
      %v956 = vpop.f32.mrf.mxu0
      %v957 = vadd.f32 0.0, %v956
      %v958 = vpop.f32.mrf.mxu0
      %v959 = vadd.f32 0.0, %v958
      %960 = vmatmul.bf16.gmra.mxu0 %v939
      %v961 = vpop.f32.mrf.mxu0
      %v962 = vadd.f32 0.0, %v961
      %v963 = vpop.f32.mrf.mxu0
      %v964 = vadd.f32 0.0, %v963
      %965 = vmatmul.bf16.gmra.mxu0 %v942
      %v966 = vpop.f32.mrf.mxu0
      %v967 = vadd.f32 0.0, %v966
      %v968 = vpop.f32.mrf.mxu0
      %v969 = vadd.f32 0.0, %v968
      %970 = vmatmul.bf16.gmra.mxu0 %v945
      %v971 = vpop.f32.mrf.mxu0
      %v972 = vadd.f32 0.0, %v971
      %v973 = vpop.f32.mrf.mxu0
      %v974 = vadd.f32 0.0, %v973
      %975 = vdwg.mxu0
      %v976 = vadd.f32 %v898, %v957
      %v977 = vadd.f32 %v899, %v959
      %v978 = vadd.f32 %v900, %v962
      %v979 = vadd.f32 %v901, %v964
      %v980 = vadd.f32 %v902, %v967
      %v981 = vadd.f32 %v903, %v969
      %v982 = vadd.f32 %v904, %v972
      %v983 = vadd.f32 %v905, %v974
      %v984 = vmax.f32 %v976, 0.0
      %v985 = vmax.f32 %v977, 0.0
      %v986 = vmax.f32 %v978, 0.0
      %v987 = vmax.f32 %v979, 0.0
      %v988 = vmax.f32 %v980, 0.0
      %v989 = vmax.f32 %v981, 0.0
      %v990 = vmax.f32 %v982, 0.0
      %v991 = vmax.f32 %v983, 0.0
      %v992 = vsel %vm282, %v984, %v976
      %v993 = vsel %vm282, %v985, %v977
      %v994 = vsel %vm282, %v986, %v978
      %v995 = vsel %vm282, %v987, %v979
      %v996 = vsel %vm282, %v988, %v980
      %v997 = vsel %vm282, %v989, %v981
      %v998 = vsel %vm282, %v990, %v982
      %v999 = vsel %vm282, %v991, %v983
      %v1000 = vpack.c.bf16 %v992, %v992
      %v1001 = vpack.c.bf16 %v993, %v993
      %v1002 = vpack.c.bf16 %v994, %v994
      %v1003 = vpack.c.bf16 %v995, %v995
      %v1004 = vpack.c.bf16 %v996, %v996
      %v1005 = vpack.c.bf16 %v997, %v997
      %v1006 = vpack.c.bf16 %v998, %v998
      %v1007 = vpack.c.bf16 %v999, %v999
      %s1008 = scalar_lea.vmem [#allocation2], 64
      %1009 = vst.msk [vmem:[%s1008] sm:$0xf] %vm473, %v1000
      %1010 = vst.msk [vmem:[%s1008 + $0x4] sm:$0xf] %vm473, %v1001
      %1011 = vst.msk [vmem:[%s1008 + $0x8] sm:$0xf] %vm473, %v1002
      %1012 = vst.msk [vmem:[%s1008 + $0xc] sm:$0xf] %vm473, %v1003
      %1013 = vst.msk [vmem:[%s1008 + $0x10] sm:$0xf] %vm473, %v1004
      %1014 = vst.msk [vmem:[%s1008 + $0x14] sm:$0xf] %vm473, %v1005
      %1015 = vst.msk [vmem:[%s1008 + $0x18] sm:$0xf] %vm473, %v1006
      %1016 = vst.msk [vmem:[%s1008 + $0x1c] sm:$0xf] %vm473, %v1007
      %v1017 = vld [vmem:[%s906] sm:$0xf]
      %v1018 = vld [vmem:[%s906 + $0x4] sm:$0xf]
      %v1019 = vld [vmem:[%s906 + $0x8] sm:$0xf]
      %v1020 = vld [vmem:[%s906 + $0xc] sm:$0xf]
      %v1021 = vld [vmem:[%s906 + $0x10] sm:$0xf]
      %v1022 = vld [vmem:[%s906 + $0x14] sm:$0xf]
      %v1023 = vld [vmem:[%s906 + $0x18] sm:$0xf]
      %v1024 = vld [vmem:[%s906 + $0x1c] sm:$0xf]
      %v1033 = vunpack.c.l.b16 %v1017
      %v1034 = vunpack.c.l.b16 %v1018
      %v1035 = vunpack.c.l.b16 %v1019
      %v1036 = vunpack.c.l.b16 %v1020
      %v1037 = vunpack.c.l.b16 %v1021
      %v1038 = vunpack.c.l.b16 %v1022
      %v1039 = vunpack.c.l.b16 %v1023
      %v1040 = vunpack.c.l.b16 %v1024
      %v1041 = vpack.c.b16 %v1034, %v1033
      %v1042 = vpack.c.b16 %v1036, %v1035
      %v1043 = vpack.c.b16 %v1038, %v1037
      %v1044 = vpack.c.b16 %v1040, %v1039
      %v1046 = vsel %vm311, %v1041, 0
      %v1049 = vsel %vm311, %v1042, 0
      %v1052 = vsel %vm311, %v1043, 0
      %v1055 = vsel %vm311, %v1044, 0
      %1057 = vmatpush.bf16.msra.mxu0 0
      %1058 = vmatpush.bf16.msra.mxu0 0
      %1059 = vmatpush.bf16.msra.mxu0 0
      %1060 = vmatpush.bf16.msra.mxu0 0
      %1061 = vmatpush.bf16.msra.mxu0 0
      %1062 = vmatpush.bf16.msra.mxu0 0
      %1063 = vmatpush.bf16.msra.mxu0 0
      %1064 = vmatpush.bf16.msra.mxu0 %v523
      %1065 = vmatmul.bf16.gmra.mxu0 %v1046
      %v1066 = vpop.f32.mrf.mxu0
      %v1067 = vadd.f32 0.0, %v1066
      %v1068 = vpop.f32.mrf.mxu0
      %v1069 = vadd.f32 0.0, %v1068
      %1070 = vmatmul.bf16.gmra.mxu0 %v1049
      %v1071 = vpop.f32.mrf.mxu0
      %v1072 = vadd.f32 0.0, %v1071
      %v1073 = vpop.f32.mrf.mxu0
      %v1074 = vadd.f32 0.0, %v1073
      %1075 = vmatmul.bf16.gmra.mxu0 %v1052
      %v1076 = vpop.f32.mrf.mxu0
      %v1077 = vadd.f32 0.0, %v1076
      %v1078 = vpop.f32.mrf.mxu0
      %v1079 = vadd.f32 0.0, %v1078
      %1080 = vmatmul.bf16.gmra.mxu0 %v1055
      %v1081 = vpop.f32.mrf.mxu0
      %v1082 = vadd.f32 0.0, %v1081
      %v1083 = vpop.f32.mrf.mxu0
      %v1084 = vadd.f32 0.0, %v1083
      %1085 = vdwg.mxu0
      %v1086 = vadd.f32 %v358, %v1067
      %v1087 = vadd.f32 %v358, %v1069
      %v1088 = vadd.f32 %v358, %v1072
      %v1089 = vadd.f32 %v358, %v1074
      %v1090 = vadd.f32 %v358, %v1077
      %v1091 = vadd.f32 %v358, %v1079
      %v1092 = vadd.f32 %v358, %v1082
      %v1093 = vadd.f32 %v358, %v1084
      %s1094 = scalar_lea.vmem %s252, 192
      %v1095 = vld [vmem:[%s1094] sm:$0xf]
      %v1096 = vld [vmem:[%s1094 + $0x4] sm:$0xf]
      %v1097 = vld [vmem:[%s1094 + $0x8] sm:$0xf]
      %v1098 = vld [vmem:[%s1094 + $0xc] sm:$0xf]
      %v1099 = vld [vmem:[%s1094 + $0x10] sm:$0xf]
      %v1100 = vld [vmem:[%s1094 + $0x14] sm:$0xf]
      %v1101 = vld [vmem:[%s1094 + $0x18] sm:$0xf]
      %v1102 = vld [vmem:[%s1094 + $0x1c] sm:$0xf]
      %v1111 = vunpack.c.l.b16 %v1095
      %v1112 = vunpack.c.l.b16 %v1096
      %v1113 = vunpack.c.l.b16 %v1097
      %v1114 = vunpack.c.l.b16 %v1098
      %v1115 = vunpack.c.l.b16 %v1099
      %v1116 = vunpack.c.l.b16 %v1100
      %v1117 = vunpack.c.l.b16 %v1101
      %v1118 = vunpack.c.l.b16 %v1102
      %v1119 = vpack.c.b16 %v1112, %v1111
      %v1120 = vpack.c.b16 %v1114, %v1113
      %v1121 = vpack.c.b16 %v1116, %v1115
      %v1122 = vpack.c.b16 %v1118, %v1117
      %v1124 = vsel %vm311, %v1119, 0
      %v1127 = vsel %vm311, %v1120, 0
      %v1130 = vsel %vm311, %v1121, 0
      %v1133 = vsel %vm311, %v1122, 0
      %1135 = vmatpush.bf16.msra.mxu0 0
      %1136 = vmatpush.bf16.msra.mxu0 0
      %1137 = vmatpush.bf16.msra.mxu0 0
      %1138 = vmatpush.bf16.msra.mxu0 0
      %1139 = vmatpush.bf16.msra.mxu0 0
      %1140 = vmatpush.bf16.msra.mxu0 0
      %1141 = vmatpush.bf16.msra.mxu0 0
      %1142 = vmatpush.bf16.msra.mxu0 %v326
      %1143 = vmatmul.bf16.gmra.mxu0 %v1124
      %v1144 = vpop.f32.mrf.mxu0
      %v1145 = vadd.f32 0.0, %v1144
      %v1146 = vpop.f32.mrf.mxu0
      %v1147 = vadd.f32 0.0, %v1146
      %1148 = vmatmul.bf16.gmra.mxu0 %v1127
      %v1149 = vpop.f32.mrf.mxu0
      %v1150 = vadd.f32 0.0, %v1149
      %v1151 = vpop.f32.mrf.mxu0
      %v1152 = vadd.f32 0.0, %v1151
      %1153 = vmatmul.bf16.gmra.mxu0 %v1130
      %v1154 = vpop.f32.mrf.mxu0
      %v1155 = vadd.f32 0.0, %v1154
      %v1156 = vpop.f32.mrf.mxu0
      %v1157 = vadd.f32 0.0, %v1156
      %1158 = vmatmul.bf16.gmra.mxu0 %v1133
      %v1159 = vpop.f32.mrf.mxu0
      %v1160 = vadd.f32 0.0, %v1159
      %v1161 = vpop.f32.mrf.mxu0
      %v1162 = vadd.f32 0.0, %v1161
      %1163 = vdwg.mxu0
      %v1164 = vadd.f32 %v1086, %v1145
      %v1165 = vadd.f32 %v1087, %v1147
      %v1166 = vadd.f32 %v1088, %v1150
      %v1167 = vadd.f32 %v1089, %v1152
      %v1168 = vadd.f32 %v1090, %v1155
      %v1169 = vadd.f32 %v1091, %v1157
      %v1170 = vadd.f32 %v1092, %v1160
      %v1171 = vadd.f32 %v1093, %v1162
      %s1172 = scalar_lea.vmem %s252, 224
      %v1173 = vld [vmem:[%s1172] sm:$0xf]
      %v1174 = vld [vmem:[%s1172 + $0x4] sm:$0xf]
      %v1175 = vld [vmem:[%s1172 + $0x8] sm:$0xf]
      %v1176 = vld [vmem:[%s1172 + $0xc] sm:$0xf]
      %v1177 = vld [vmem:[%s1172 + $0x10] sm:$0xf]
      %v1178 = vld [vmem:[%s1172 + $0x14] sm:$0xf]
      %v1179 = vld [vmem:[%s1172 + $0x18] sm:$0xf]
      %v1180 = vld [vmem:[%s1172 + $0x1c] sm:$0xf]
      %v1189 = vunpack.c.l.b16 %v1173
      %v1190 = vunpack.c.l.b16 %v1174
      %v1191 = vunpack.c.l.b16 %v1175
      %v1192 = vunpack.c.l.b16 %v1176
      %v1193 = vunpack.c.l.b16 %v1177
      %v1194 = vunpack.c.l.b16 %v1178
      %v1195 = vunpack.c.l.b16 %v1179
      %v1196 = vunpack.c.l.b16 %v1180
      %v1197 = vpack.c.b16 %v1190, %v1189
      %v1198 = vpack.c.b16 %v1192, %v1191
      %v1199 = vpack.c.b16 %v1194, %v1193
      %v1200 = vpack.c.b16 %v1196, %v1195
      %v1202 = vsel %vm311, %v1197, 0
      %v1205 = vsel %vm311, %v1198, 0
      %v1208 = vsel %vm311, %v1199, 0
      %v1211 = vsel %vm311, %v1200, 0
      %1213 = vmatpush.bf16.msra.mxu0 0
      %1214 = vmatpush.bf16.msra.mxu0 0
      %1215 = vmatpush.bf16.msra.mxu0 0
      %1216 = vmatpush.bf16.msra.mxu0 0
      %1217 = vmatpush.bf16.msra.mxu0 0
      %1218 = vmatpush.bf16.msra.mxu0 0
      %1219 = vmatpush.bf16.msra.mxu0 0
      %1220 = vmatpush.bf16.msra.mxu0 %v410
      %1221 = vmatmul.bf16.gmra.mxu0 %v1202
      %v1222 = vpop.f32.mrf.mxu0
      %v1223 = vadd.f32 0.0, %v1222
      %v1224 = vpop.f32.mrf.mxu0
      %v1225 = vadd.f32 0.0, %v1224
      %1226 = vmatmul.bf16.gmra.mxu0 %v1205
      %v1227 = vpop.f32.mrf.mxu0
      %v1228 = vadd.f32 0.0, %v1227
      %v1229 = vpop.f32.mrf.mxu0
      %v1230 = vadd.f32 0.0, %v1229
      %1231 = vmatmul.bf16.gmra.mxu0 %v1208
      %v1232 = vpop.f32.mrf.mxu0
      %v1233 = vadd.f32 0.0, %v1232
      %v1234 = vpop.f32.mrf.mxu0
      %v1235 = vadd.f32 0.0, %v1234
      %1236 = vmatmul.bf16.gmra.mxu0 %v1211
      %v1237 = vpop.f32.mrf.mxu0
      %v1238 = vadd.f32 0.0, %v1237
      %v1239 = vpop.f32.mrf.mxu0
      %v1240 = vadd.f32 0.0, %v1239
      %1241 = vdwg.mxu0
      %v1242 = vadd.f32 %v1164, %v1223
      %v1243 = vadd.f32 %v1165, %v1225
      %v1244 = vadd.f32 %v1166, %v1228
      %v1245 = vadd.f32 %v1167, %v1230
      %v1246 = vadd.f32 %v1168, %v1233
      %v1247 = vadd.f32 %v1169, %v1235
      %v1248 = vadd.f32 %v1170, %v1238
      %v1249 = vadd.f32 %v1171, %v1240
      %v1250 = vmax.f32 %v1242, 0.0
      %v1251 = vmax.f32 %v1243, 0.0
      %v1252 = vmax.f32 %v1244, 0.0
      %v1253 = vmax.f32 %v1245, 0.0
      %v1254 = vmax.f32 %v1246, 0.0
      %v1255 = vmax.f32 %v1247, 0.0
      %v1256 = vmax.f32 %v1248, 0.0
      %v1257 = vmax.f32 %v1249, 0.0
      %v1258 = vsel %vm282, %v1250, %v1242
      %v1259 = vsel %vm282, %v1251, %v1243
      %v1260 = vsel %vm282, %v1252, %v1244
      %v1261 = vsel %vm282, %v1253, %v1245
      %v1262 = vsel %vm282, %v1254, %v1246
      %v1263 = vsel %vm282, %v1255, %v1247
      %v1264 = vsel %vm282, %v1256, %v1248
      %v1265 = vsel %vm282, %v1257, %v1249
      %v1266 = vpack.c.bf16 %v1258, %v1258
      %v1267 = vpack.c.bf16 %v1259, %v1259
      %v1268 = vpack.c.bf16 %v1260, %v1260
      %v1269 = vpack.c.bf16 %v1261, %v1261
      %v1270 = vpack.c.bf16 %v1262, %v1262
      %v1271 = vpack.c.bf16 %v1263, %v1263
      %v1272 = vpack.c.bf16 %v1264, %v1264
      %v1273 = vpack.c.bf16 %v1265, %v1265
      %s1274 = scalar_lea.vmem [#allocation2], 96
      %1275 = vst.msk [vmem:[%s1274] sm:$0xf] %vm473, %v1266
      %1276 = vst.msk [vmem:[%s1274 + $0x4] sm:$0xf] %vm473, %v1267
      %1277 = vst.msk [vmem:[%s1274 + $0x8] sm:$0xf] %vm473, %v1268
      %1278 = vst.msk [vmem:[%s1274 + $0xc] sm:$0xf] %vm473, %v1269
      %1279 = vst.msk [vmem:[%s1274 + $0x10] sm:$0xf] %vm473, %v1270
      %1280 = vst.msk [vmem:[%s1274 + $0x14] sm:$0xf] %vm473, %v1271
      %1281 = vst.msk [vmem:[%s1274 + $0x18] sm:$0xf] %vm473, %v1272
      %1282 = vst.msk [vmem:[%s1274 + $0x1c] sm:$0xf] %vm473, %v1273
      %v1283 = vld [vmem:[#allocation2] sm:$0xf]
      %v1284 = vld [vmem:[#allocation2 + $0x4] sm:$0xf]
      %v1285 = vld [vmem:[#allocation2 + $0x8] sm:$0xf]
      %v1286 = vld [vmem:[#allocation2 + $0xc] sm:$0xf]
      %v1287 = vld [vmem:[#allocation2 + $0x10] sm:$0xf]
      %v1288 = vld [vmem:[#allocation2 + $0x14] sm:$0xf]
      %v1289 = vld [vmem:[#allocation2 + $0x18] sm:$0xf]
      %v1290 = vld [vmem:[#allocation2 + $0x1c] sm:$0xf]
      %v1299 = vunpack.c.l.b16 %v1283
      %v1300 = vunpack.c.l.b16 %v1284
      %v1301 = vunpack.c.l.b16 %v1285
      %v1302 = vunpack.c.l.b16 %v1286
      %v1303 = vunpack.c.l.b16 %v1287
      %v1304 = vunpack.c.l.b16 %v1288
      %v1305 = vunpack.c.l.b16 %v1289
      %v1306 = vunpack.c.l.b16 %v1290
      %v1307 = vpack.c.b16 %v1300, %v1299
      %v1308 = vpack.c.b16 %v1302, %v1301
      %v1309 = vpack.c.b16 %v1304, %v1303
      %v1310 = vpack.c.b16 %v1306, %v1305
      %v1313 = vunpack.c.l.b16 %v273
      %v1314 = vunpack.c.l.b16 %v274
      %v1315 = vpack.c.b16 %v1314, %v1313
      %vm1317 = vcmask 130048
      %v1319 = vsel %vm1317, %v1307, 0
      %v1322 = vsel %vm1317, %v1308, 0
      %v1325 = vsel %vm1317, %v1309, 0
      %v1328 = vsel %vm1317, %v1310, 0
      %1330 = vmatpush.bf16.msra.mxu0 0
      %1331 = vmatpush.bf16.msra.mxu0 0
      %1332 = vmatpush.bf16.msra.mxu0 0
      %1333 = vmatpush.bf16.msra.mxu0 0
      %1334 = vmatpush.bf16.msra.mxu0 0
      %1335 = vmatpush.bf16.msra.mxu0 0
      %1336 = vmatpush.bf16.msra.mxu0 0
      %1337 = vmatpush.bf16.msra.mxu0 %v1315
      %1338 = vmatmul.bf16.gmra.mxu0 %v1319
      %v1339 = vpop.f32.mrf.mxu0
      %v1340 = vadd.f32 0.0, %v1339
      %v1341 = vpop.f32.mrf.mxu0
      %v1342 = vadd.f32 0.0, %v1341
      %1343 = vmatmul.bf16.gmra.mxu0 %v1322
      %v1344 = vpop.f32.mrf.mxu0
      %v1345 = vadd.f32 0.0, %v1344
      %v1346 = vpop.f32.mrf.mxu0
      %v1347 = vadd.f32 0.0, %v1346
      %1348 = vmatmul.bf16.gmra.mxu0 %v1325
      %v1349 = vpop.f32.mrf.mxu0
      %v1350 = vadd.f32 0.0, %v1349
      %v1351 = vpop.f32.mrf.mxu0
      %v1352 = vadd.f32 0.0, %v1351
      %1353 = vmatmul.bf16.gmra.mxu0 %v1328
      %v1354 = vpop.f32.mrf.mxu0
      %v1355 = vadd.f32 0.0, %v1354
      %v1356 = vpop.f32.mrf.mxu0
      %v1357 = vadd.f32 0.0, %v1356
      %1358 = vdwg.mxu0
      %v1360 = vperm.slane %v279, 0
      %v1362 = vadd.f32 %v1360, %v1340
      %v1363 = vadd.f32 %v1360, %v1342
      %v1364 = vadd.f32 %v1360, %v1345
      %v1365 = vadd.f32 %v1360, %v1347
      %v1366 = vadd.f32 %v1360, %v1350
      %v1367 = vadd.f32 %v1360, %v1352
      %v1368 = vadd.f32 %v1360, %v1355
      %v1369 = vadd.f32 %v1360, %v1357
      %v1370 = vld [vmem:[%s742] sm:$0xf]
      %v1371 = vld [vmem:[%s742 + $0x4] sm:$0xf]
      %v1372 = vld [vmem:[%s742 + $0x8] sm:$0xf]
      %v1373 = vld [vmem:[%s742 + $0xc] sm:$0xf]
      %v1374 = vld [vmem:[%s742 + $0x10] sm:$0xf]
      %v1375 = vld [vmem:[%s742 + $0x14] sm:$0xf]
      %v1376 = vld [vmem:[%s742 + $0x18] sm:$0xf]
      %v1377 = vld [vmem:[%s742 + $0x1c] sm:$0xf]
      %v1386 = vunpack.c.l.b16 %v1370
      %v1387 = vunpack.c.l.b16 %v1371
      %v1388 = vunpack.c.l.b16 %v1372
      %v1389 = vunpack.c.l.b16 %v1373
      %v1390 = vunpack.c.l.b16 %v1374
      %v1391 = vunpack.c.l.b16 %v1375
      %v1392 = vunpack.c.l.b16 %v1376
      %v1393 = vunpack.c.l.b16 %v1377
      %v1394 = vpack.c.b16 %v1387, %v1386
      %v1395 = vpack.c.b16 %v1389, %v1388
      %v1396 = vpack.c.b16 %v1391, %v1390
      %v1397 = vpack.c.b16 %v1393, %v1392
      %v1400 = vunpack.c.l.b16 %v276
      %v1401 = vunpack.c.l.b16 %v277
      %v1402 = vpack.c.b16 %v1401, %v1400
      %v1405 = vsel %vm1317, %v1394, 0
      %v1408 = vsel %vm1317, %v1395, 0
      %v1411 = vsel %vm1317, %v1396, 0
      %v1414 = vsel %vm1317, %v1397, 0
      %1416 = vmatpush.bf16.msra.mxu0 0
      %1417 = vmatpush.bf16.msra.mxu0 0
      %1418 = vmatpush.bf16.msra.mxu0 0
      %1419 = vmatpush.bf16.msra.mxu0 0
      %1420 = vmatpush.bf16.msra.mxu0 0
      %1421 = vmatpush.bf16.msra.mxu0 0
      %1422 = vmatpush.bf16.msra.mxu0 0
      %1423 = vmatpush.bf16.msra.mxu0 %v1402
      %1424 = vmatmul.bf16.gmra.mxu0 %v1405
      %v1425 = vpop.f32.mrf.mxu0
      %v1426 = vadd.f32 0.0, %v1425
      %v1427 = vpop.f32.mrf.mxu0
      %v1428 = vadd.f32 0.0, %v1427
      %1429 = vmatmul.bf16.gmra.mxu0 %v1408
      %v1430 = vpop.f32.mrf.mxu0
      %v1431 = vadd.f32 0.0, %v1430
      %v1432 = vpop.f32.mrf.mxu0
      %v1433 = vadd.f32 0.0, %v1432
      %1434 = vmatmul.bf16.gmra.mxu0 %v1411
      %v1435 = vpop.f32.mrf.mxu0
      %v1436 = vadd.f32 0.0, %v1435
      %v1437 = vpop.f32.mrf.mxu0
      %v1438 = vadd.f32 0.0, %v1437
      %1439 = vmatmul.bf16.gmra.mxu0 %v1414
      %v1440 = vpop.f32.mrf.mxu0
      %v1441 = vadd.f32 0.0, %v1440
      %v1442 = vpop.f32.mrf.mxu0
      %v1443 = vadd.f32 0.0, %v1442
      %1444 = vdwg.mxu0
      %v1445 = vadd.f32 %v1362, %v1426
      %v1446 = vadd.f32 %v1363, %v1428
      %v1447 = vadd.f32 %v1364, %v1431
      %v1448 = vadd.f32 %v1365, %v1433
      %v1449 = vadd.f32 %v1366, %v1436
      %v1450 = vadd.f32 %v1367, %v1438
      %v1451 = vadd.f32 %v1368, %v1441
      %v1452 = vadd.f32 %v1369, %v1443
      %v1453 = vmax.f32 %v1445, 0.0
      %v1454 = vmax.f32 %v1446, 0.0
      %v1455 = vmax.f32 %v1447, 0.0
      %v1456 = vmax.f32 %v1448, 0.0
      %v1457 = vmax.f32 %v1449, 0.0
      %v1458 = vmax.f32 %v1450, 0.0
      %v1459 = vmax.f32 %v1451, 0.0
      %v1460 = vmax.f32 %v1452, 0.0
      %vm1461 = vcmask 64512
      %1462 = vst.msk [vmem:[%s262] sm:$0xff] %vm1461, %v1453
      %1463 = vst.msk [vmem:[%s262 + $0x8] sm:$0xff] %vm1461, %v1454
      %1464 = vst.msk [vmem:[%s262 + $0x10] sm:$0xff] %vm1461, %v1455
      %1465 = vst.msk [vmem:[%s262 + $0x18] sm:$0xff] %vm1461, %v1456
      %1466 = vst.msk [vmem:[%s262 + $0x20] sm:$0xff] %vm1461, %v1457
      %1467 = vst.msk [vmem:[%s262 + $0x28] sm:$0xff] %vm1461, %v1458
      %1468 = vst.msk [vmem:[%s262 + $0x30] sm:$0xff] %vm1461, %v1459
      %1469 = vst.msk [vmem:[%s262 + $0x38] sm:$0xff] %vm1461, %v1460
      %v1470 = vld [vmem:[#allocation2] sm:$0xf]
      %v1471 = vld [vmem:[#allocation2 + $0x4] sm:$0xf]
      %v1472 = vld [vmem:[#allocation2 + $0x8] sm:$0xf]
      %v1473 = vld [vmem:[#allocation2 + $0xc] sm:$0xf]
      %v1474 = vld [vmem:[#allocation2 + $0x10] sm:$0xf]
      %v1475 = vld [vmem:[#allocation2 + $0x14] sm:$0xf]
      %v1476 = vld [vmem:[#allocation2 + $0x18] sm:$0xf]
      %v1477 = vld [vmem:[#allocation2 + $0x1c] sm:$0xf]
      %v1486 = vunpack.c.l.b16 %v1470
      %v1487 = vunpack.c.l.b16 %v1471
      %v1488 = vunpack.c.l.b16 %v1472
      %v1489 = vunpack.c.l.b16 %v1473
      %v1490 = vunpack.c.l.b16 %v1474
      %v1491 = vunpack.c.l.b16 %v1475
      %v1492 = vunpack.c.l.b16 %v1476
      %v1493 = vunpack.c.l.b16 %v1477
      %v1494 = vpack.c.b16 %v1487, %v1486
      %v1495 = vpack.c.b16 %v1489, %v1488
      %v1496 = vpack.c.b16 %v1491, %v1490
      %v1497 = vpack.c.b16 %v1493, %v1492
      %v1500 = vunpack.c.l.b16 %v270
      %v1501 = vunpack.c.l.b16 %v271
      %v1502 = vpack.c.b16 %v1501, %v1500
      %v1505 = vsel %vm1317, %v1494, 0
      %v1508 = vsel %vm1317, %v1495, 0
      %v1511 = vsel %vm1317, %v1496, 0
      %v1514 = vsel %vm1317, %v1497, 0
      %1516 = vmatpush.bf16.msra.mxu0 0
      %1517 = vmatpush.bf16.msra.mxu0 0
      %1518 = vmatpush.bf16.msra.mxu0 0
      %1519 = vmatpush.bf16.msra.mxu0 0
      %1520 = vmatpush.bf16.msra.mxu0 0
      %1521 = vmatpush.bf16.msra.mxu0 0
      %1522 = vmatpush.bf16.msra.mxu0 0
      %1523 = vmatpush.bf16.msra.mxu0 %v1502
      %1524 = vmatmul.bf16.gmra.mxu0 %v1505
      %v1525 = vpop.f32.mrf.mxu0
      %v1526 = vadd.f32 0.0, %v1525
      %v1527 = vpop.f32.mrf.mxu0
      %v1528 = vadd.f32 0.0, %v1527
      %1529 = vmatmul.bf16.gmra.mxu0 %v1508
      %v1530 = vpop.f32.mrf.mxu0
      %v1531 = vadd.f32 0.0, %v1530
      %v1532 = vpop.f32.mrf.mxu0
      %v1533 = vadd.f32 0.0, %v1532
      %1534 = vmatmul.bf16.gmra.mxu0 %v1511
      %v1535 = vpop.f32.mrf.mxu0
      %v1536 = vadd.f32 0.0, %v1535
      %v1537 = vpop.f32.mrf.mxu0
      %v1538 = vadd.f32 0.0, %v1537
      %1539 = vmatmul.bf16.gmra.mxu0 %v1514
      %v1540 = vpop.f32.mrf.mxu0
      %v1541 = vadd.f32 0.0, %v1540
      %v1542 = vpop.f32.mrf.mxu0
      %v1543 = vadd.f32 0.0, %v1542
      %1544 = vdwg.mxu0
      %v1545 = vadd.f32 %v1360, %v1526
      %v1546 = vadd.f32 %v1360, %v1528
      %v1547 = vadd.f32 %v1360, %v1531
      %v1548 = vadd.f32 %v1360, %v1533
      %v1549 = vadd.f32 %v1360, %v1536
      %v1550 = vadd.f32 %v1360, %v1538
      %v1551 = vadd.f32 %v1360, %v1541
      %v1552 = vadd.f32 %v1360, %v1543
      %v1553 = vld [vmem:[%s742] sm:$0xf]
      %v1554 = vld [vmem:[%s742 + $0x4] sm:$0xf]
      %v1555 = vld [vmem:[%s742 + $0x8] sm:$0xf]
      %v1556 = vld [vmem:[%s742 + $0xc] sm:$0xf]
      %v1557 = vld [vmem:[%s742 + $0x10] sm:$0xf]
      %v1558 = vld [vmem:[%s742 + $0x14] sm:$0xf]
      %v1559 = vld [vmem:[%s742 + $0x18] sm:$0xf]
      %v1560 = vld [vmem:[%s742 + $0x1c] sm:$0xf]
      %v1569 = vunpack.c.l.b16 %v1553
      %v1570 = vunpack.c.l.b16 %v1554
      %v1571 = vunpack.c.l.b16 %v1555
      %v1572 = vunpack.c.l.b16 %v1556
      %v1573 = vunpack.c.l.b16 %v1557
      %v1574 = vunpack.c.l.b16 %v1558
      %v1575 = vunpack.c.l.b16 %v1559
      %v1576 = vunpack.c.l.b16 %v1560
      %v1577 = vpack.c.b16 %v1570, %v1569
      %v1578 = vpack.c.b16 %v1572, %v1571
      %v1579 = vpack.c.b16 %v1574, %v1573
      %v1580 = vpack.c.b16 %v1576, %v1575
      %v1582 = vsel %vm1317, %v1577, 0
      %v1585 = vsel %vm1317, %v1578, 0
      %v1588 = vsel %vm1317, %v1579, 0
      %v1591 = vsel %vm1317, %v1580, 0
      %1593 = vmatpush.bf16.msra.mxu0 0
      %1594 = vmatpush.bf16.msra.mxu0 0
      %1595 = vmatpush.bf16.msra.mxu0 0
      %1596 = vmatpush.bf16.msra.mxu0 0
      %1597 = vmatpush.bf16.msra.mxu0 0
      %1598 = vmatpush.bf16.msra.mxu0 0
      %1599 = vmatpush.bf16.msra.mxu0 0
      %1600 = vmatpush.bf16.msra.mxu0 %v1315
      %1601 = vmatmul.bf16.gmra.mxu0 %v1582
      %v1602 = vpop.f32.mrf.mxu0
      %v1603 = vadd.f32 0.0, %v1602
      %v1604 = vpop.f32.mrf.mxu0
      %v1605 = vadd.f32 0.0, %v1604
      %1606 = vmatmul.bf16.gmra.mxu0 %v1585
      %v1607 = vpop.f32.mrf.mxu0
      %v1608 = vadd.f32 0.0, %v1607
      %v1609 = vpop.f32.mrf.mxu0
      %v1610 = vadd.f32 0.0, %v1609
      %1611 = vmatmul.bf16.gmra.mxu0 %v1588
      %v1612 = vpop.f32.mrf.mxu0
      %v1613 = vadd.f32 0.0, %v1612
      %v1614 = vpop.f32.mrf.mxu0
      %v1615 = vadd.f32 0.0, %v1614
      %1616 = vmatmul.bf16.gmra.mxu0 %v1591
      %v1617 = vpop.f32.mrf.mxu0
      %v1618 = vadd.f32 0.0, %v1617
      %v1619 = vpop.f32.mrf.mxu0
      %v1620 = vadd.f32 0.0, %v1619
      %1621 = vdwg.mxu0
      %v1622 = vadd.f32 %v1545, %v1603
      %v1623 = vadd.f32 %v1546, %v1605
      %v1624 = vadd.f32 %v1547, %v1608
      %v1625 = vadd.f32 %v1548, %v1610
      %v1626 = vadd.f32 %v1549, %v1613
      %v1627 = vadd.f32 %v1550, %v1615
      %v1628 = vadd.f32 %v1551, %v1618
      %v1629 = vadd.f32 %v1552, %v1620
      %v1630 = vld [vmem:[%s1008] sm:$0xf]
      %v1631 = vld [vmem:[%s1008 + $0x4] sm:$0xf]
      %v1632 = vld [vmem:[%s1008 + $0x8] sm:$0xf]
      %v1633 = vld [vmem:[%s1008 + $0xc] sm:$0xf]
      %v1634 = vld [vmem:[%s1008 + $0x10] sm:$0xf]
      %v1635 = vld [vmem:[%s1008 + $0x14] sm:$0xf]
      %v1636 = vld [vmem:[%s1008 + $0x18] sm:$0xf]
      %v1637 = vld [vmem:[%s1008 + $0x1c] sm:$0xf]
      %v1646 = vunpack.c.l.b16 %v1630
      %v1647 = vunpack.c.l.b16 %v1631
      %v1648 = vunpack.c.l.b16 %v1632
      %v1649 = vunpack.c.l.b16 %v1633
      %v1650 = vunpack.c.l.b16 %v1634
      %v1651 = vunpack.c.l.b16 %v1635
      %v1652 = vunpack.c.l.b16 %v1636
      %v1653 = vunpack.c.l.b16 %v1637
      %v1654 = vpack.c.b16 %v1647, %v1646
      %v1655 = vpack.c.b16 %v1649, %v1648
      %v1656 = vpack.c.b16 %v1651, %v1650
      %v1657 = vpack.c.b16 %v1653, %v1652
      %v1659 = vsel %vm1317, %v1654, 0
      %v1662 = vsel %vm1317, %v1655, 0
      %v1665 = vsel %vm1317, %v1656, 0
      %v1668 = vsel %vm1317, %v1657, 0
      %1670 = vmatpush.bf16.msra.mxu0 0
      %1671 = vmatpush.bf16.msra.mxu0 0
      %1672 = vmatpush.bf16.msra.mxu0 0
      %1673 = vmatpush.bf16.msra.mxu0 0
      %1674 = vmatpush.bf16.msra.mxu0 0
      %1675 = vmatpush.bf16.msra.mxu0 0
      %1676 = vmatpush.bf16.msra.mxu0 0
      %1677 = vmatpush.bf16.msra.mxu0 %v1402
      %1678 = vmatmul.bf16.gmra.mxu0 %v1659
      %v1679 = vpop.f32.mrf.mxu0
      %v1680 = vadd.f32 0.0, %v1679
      %v1681 = vpop.f32.mrf.mxu0
      %v1682 = vadd.f32 0.0, %v1681
      %1683 = vmatmul.bf16.gmra.mxu0 %v1662
      %v1684 = vpop.f32.mrf.mxu0
      %v1685 = vadd.f32 0.0, %v1684
      %v1686 = vpop.f32.mrf.mxu0
      %v1687 = vadd.f32 0.0, %v1686
      %1688 = vmatmul.bf16.gmra.mxu0 %v1665
      %v1689 = vpop.f32.mrf.mxu0
      %v1690 = vadd.f32 0.0, %v1689
      %v1691 = vpop.f32.mrf.mxu0
      %v1692 = vadd.f32 0.0, %v1691
      %1693 = vmatmul.bf16.gmra.mxu0 %v1668
      %v1694 = vpop.f32.mrf.mxu0
      %v1695 = vadd.f32 0.0, %v1694
      %v1696 = vpop.f32.mrf.mxu0
      %v1697 = vadd.f32 0.0, %v1696
      %1698 = vdwg.mxu0
      %v1699 = vadd.f32 %v1622, %v1680
      %v1700 = vadd.f32 %v1623, %v1682
      %v1701 = vadd.f32 %v1624, %v1685
      %v1702 = vadd.f32 %v1625, %v1687
      %v1703 = vadd.f32 %v1626, %v1690
      %v1704 = vadd.f32 %v1627, %v1692
      %v1705 = vadd.f32 %v1628, %v1695
      %v1706 = vadd.f32 %v1629, %v1697
      %v1707 = vmax.f32 %v1699, 0.0
      %v1708 = vmax.f32 %v1700, 0.0
      %v1709 = vmax.f32 %v1701, 0.0
      %v1710 = vmax.f32 %v1702, 0.0
      %v1711 = vmax.f32 %v1703, 0.0
      %v1712 = vmax.f32 %v1704, 0.0
      %v1713 = vmax.f32 %v1705, 0.0
      %v1714 = vmax.f32 %v1706, 0.0
      %s1715 = scalar_lea.vmem %s262, 64
      %1716 = vst.msk [vmem:[%s1715] sm:$0xff] %vm1461, %v1707
      %1717 = vst.msk [vmem:[%s1715 + $0x8] sm:$0xff] %vm1461, %v1708
      %1718 = vst.msk [vmem:[%s1715 + $0x10] sm:$0xff] %vm1461, %v1709
      %1719 = vst.msk [vmem:[%s1715 + $0x18] sm:$0xff] %vm1461, %v1710
      %1720 = vst.msk [vmem:[%s1715 + $0x20] sm:$0xff] %vm1461, %v1711
      %1721 = vst.msk [vmem:[%s1715 + $0x28] sm:$0xff] %vm1461, %v1712
      %1722 = vst.msk [vmem:[%s1715 + $0x30] sm:$0xff] %vm1461, %v1713
      %1723 = vst.msk [vmem:[%s1715 + $0x38] sm:$0xff] %vm1461, %v1714
      %v1724 = vld [vmem:[%s742] sm:$0xf]
      %v1725 = vld [vmem:[%s742 + $0x4] sm:$0xf]
      %v1726 = vld [vmem:[%s742 + $0x8] sm:$0xf]
      %v1727 = vld [vmem:[%s742 + $0xc] sm:$0xf]
      %v1728 = vld [vmem:[%s742 + $0x10] sm:$0xf]
      %v1729 = vld [vmem:[%s742 + $0x14] sm:$0xf]
      %v1730 = vld [vmem:[%s742 + $0x18] sm:$0xf]
      %v1731 = vld [vmem:[%s742 + $0x1c] sm:$0xf]
      %v1740 = vunpack.c.l.b16 %v1724
      %v1741 = vunpack.c.l.b16 %v1725
      %v1742 = vunpack.c.l.b16 %v1726
      %v1743 = vunpack.c.l.b16 %v1727
      %v1744 = vunpack.c.l.b16 %v1728
      %v1745 = vunpack.c.l.b16 %v1729
      %v1746 = vunpack.c.l.b16 %v1730
      %v1747 = vunpack.c.l.b16 %v1731
      %v1748 = vpack.c.b16 %v1741, %v1740
      %v1749 = vpack.c.b16 %v1743, %v1742
      %v1750 = vpack.c.b16 %v1745, %v1744
      %v1751 = vpack.c.b16 %v1747, %v1746
      %v1753 = vsel %vm1317, %v1748, 0
      %v1756 = vsel %vm1317, %v1749, 0
      %v1759 = vsel %vm1317, %v1750, 0
      %v1762 = vsel %vm1317, %v1751, 0
      %1764 = vmatpush.bf16.msra.mxu0 0
      %1765 = vmatpush.bf16.msra.mxu0 0
      %1766 = vmatpush.bf16.msra.mxu0 0
      %1767 = vmatpush.bf16.msra.mxu0 0
      %1768 = vmatpush.bf16.msra.mxu0 0
      %1769 = vmatpush.bf16.msra.mxu0 0
      %1770 = vmatpush.bf16.msra.mxu0 0
      %1771 = vmatpush.bf16.msra.mxu0 %v1502
      %1772 = vmatmul.bf16.gmra.mxu0 %v1753
      %v1773 = vpop.f32.mrf.mxu0
      %v1774 = vadd.f32 0.0, %v1773
      %v1775 = vpop.f32.mrf.mxu0
      %v1776 = vadd.f32 0.0, %v1775
      %1777 = vmatmul.bf16.gmra.mxu0 %v1756
      %v1778 = vpop.f32.mrf.mxu0
      %v1779 = vadd.f32 0.0, %v1778
      %v1780 = vpop.f32.mrf.mxu0
      %v1781 = vadd.f32 0.0, %v1780
      %1782 = vmatmul.bf16.gmra.mxu0 %v1759
      %v1783 = vpop.f32.mrf.mxu0
      %v1784 = vadd.f32 0.0, %v1783
      %v1785 = vpop.f32.mrf.mxu0
      %v1786 = vadd.f32 0.0, %v1785
      %1787 = vmatmul.bf16.gmra.mxu0 %v1762
      %v1788 = vpop.f32.mrf.mxu0
      %v1789 = vadd.f32 0.0, %v1788
      %v1790 = vpop.f32.mrf.mxu0
      %v1791 = vadd.f32 0.0, %v1790
      %1792 = vdwg.mxu0
      %v1793 = vadd.f32 %v1360, %v1774
      %v1794 = vadd.f32 %v1360, %v1776
      %v1795 = vadd.f32 %v1360, %v1779
      %v1796 = vadd.f32 %v1360, %v1781
      %v1797 = vadd.f32 %v1360, %v1784
      %v1798 = vadd.f32 %v1360, %v1786
      %v1799 = vadd.f32 %v1360, %v1789
      %v1800 = vadd.f32 %v1360, %v1791
      %v1801 = vld [vmem:[%s1008] sm:$0xf]
      %v1802 = vld [vmem:[%s1008 + $0x4] sm:$0xf]
      %v1803 = vld [vmem:[%s1008 + $0x8] sm:$0xf]
      %v1804 = vld [vmem:[%s1008 + $0xc] sm:$0xf]
      %v1805 = vld [vmem:[%s1008 + $0x10] sm:$0xf]
      %v1806 = vld [vmem:[%s1008 + $0x14] sm:$0xf]
      %v1807 = vld [vmem:[%s1008 + $0x18] sm:$0xf]
      %v1808 = vld [vmem:[%s1008 + $0x1c] sm:$0xf]
      %v1817 = vunpack.c.l.b16 %v1801
      %v1818 = vunpack.c.l.b16 %v1802
      %v1819 = vunpack.c.l.b16 %v1803
      %v1820 = vunpack.c.l.b16 %v1804
      %v1821 = vunpack.c.l.b16 %v1805
      %v1822 = vunpack.c.l.b16 %v1806
      %v1823 = vunpack.c.l.b16 %v1807
      %v1824 = vunpack.c.l.b16 %v1808
      %v1825 = vpack.c.b16 %v1818, %v1817
      %v1826 = vpack.c.b16 %v1820, %v1819
      %v1827 = vpack.c.b16 %v1822, %v1821
      %v1828 = vpack.c.b16 %v1824, %v1823
      %v1830 = vsel %vm1317, %v1825, 0
      %v1833 = vsel %vm1317, %v1826, 0
      %v1836 = vsel %vm1317, %v1827, 0
      %v1839 = vsel %vm1317, %v1828, 0
      %1841 = vmatpush.bf16.msra.mxu0 0
      %1842 = vmatpush.bf16.msra.mxu0 0
      %1843 = vmatpush.bf16.msra.mxu0 0
      %1844 = vmatpush.bf16.msra.mxu0 0
      %1845 = vmatpush.bf16.msra.mxu0 0
      %1846 = vmatpush.bf16.msra.mxu0 0
      %1847 = vmatpush.bf16.msra.mxu0 0
      %1848 = vmatpush.bf16.msra.mxu0 %v1315
      %1849 = vmatmul.bf16.gmra.mxu0 %v1830
      %v1850 = vpop.f32.mrf.mxu0
      %v1851 = vadd.f32 0.0, %v1850
      %v1852 = vpop.f32.mrf.mxu0
      %v1853 = vadd.f32 0.0, %v1852
      %1854 = vmatmul.bf16.gmra.mxu0 %v1833
      %v1855 = vpop.f32.mrf.mxu0
      %v1856 = vadd.f32 0.0, %v1855
      %v1857 = vpop.f32.mrf.mxu0
      %v1858 = vadd.f32 0.0, %v1857
      %1859 = vmatmul.bf16.gmra.mxu0 %v1836
      %v1860 = vpop.f32.mrf.mxu0
      %v1861 = vadd.f32 0.0, %v1860
      %v1862 = vpop.f32.mrf.mxu0
      %v1863 = vadd.f32 0.0, %v1862
      %1864 = vmatmul.bf16.gmra.mxu0 %v1839
      %v1865 = vpop.f32.mrf.mxu0
      %v1866 = vadd.f32 0.0, %v1865
      %v1867 = vpop.f32.mrf.mxu0
      %v1868 = vadd.f32 0.0, %v1867
      %1869 = vdwg.mxu0
      %v1870 = vadd.f32 %v1793, %v1851
      %v1871 = vadd.f32 %v1794, %v1853
      %v1872 = vadd.f32 %v1795, %v1856
      %v1873 = vadd.f32 %v1796, %v1858
      %v1874 = vadd.f32 %v1797, %v1861
      %v1875 = vadd.f32 %v1798, %v1863
      %v1876 = vadd.f32 %v1799, %v1866
      %v1877 = vadd.f32 %v1800, %v1868
      %v1878 = vld [vmem:[%s1274] sm:$0xf]
      %v1879 = vld [vmem:[%s1274 + $0x4] sm:$0xf]
      %v1880 = vld [vmem:[%s1274 + $0x8] sm:$0xf]
      %v1881 = vld [vmem:[%s1274 + $0xc] sm:$0xf]
      %v1882 = vld [vmem:[%s1274 + $0x10] sm:$0xf]
      %v1883 = vld [vmem:[%s1274 + $0x14] sm:$0xf]
      %v1884 = vld [vmem:[%s1274 + $0x18] sm:$0xf]
      %v1885 = vld [vmem:[%s1274 + $0x1c] sm:$0xf]
      %v1894 = vunpack.c.l.b16 %v1878
      %v1895 = vunpack.c.l.b16 %v1879
      %v1896 = vunpack.c.l.b16 %v1880
      %v1897 = vunpack.c.l.b16 %v1881
      %v1898 = vunpack.c.l.b16 %v1882
      %v1899 = vunpack.c.l.b16 %v1883
      %v1900 = vunpack.c.l.b16 %v1884
      %v1901 = vunpack.c.l.b16 %v1885
      %v1902 = vpack.c.b16 %v1895, %v1894
      %v1903 = vpack.c.b16 %v1897, %v1896
      %v1904 = vpack.c.b16 %v1899, %v1898
      %v1905 = vpack.c.b16 %v1901, %v1900
      %v1907 = vsel %vm1317, %v1902, 0
      %v1910 = vsel %vm1317, %v1903, 0
      %v1913 = vsel %vm1317, %v1904, 0
      %v1916 = vsel %vm1317, %v1905, 0
      %1918 = vmatpush.bf16.msra.mxu0 0
      %1919 = vmatpush.bf16.msra.mxu0 0
      %1920 = vmatpush.bf16.msra.mxu0 0
      %1921 = vmatpush.bf16.msra.mxu0 0
      %1922 = vmatpush.bf16.msra.mxu0 0
      %1923 = vmatpush.bf16.msra.mxu0 0
      %1924 = vmatpush.bf16.msra.mxu0 0
      %1925 = vmatpush.bf16.msra.mxu0 %v1402
      %1926 = vmatmul.bf16.gmra.mxu0 %v1907
      %v1927 = vpop.f32.mrf.mxu0
      %v1928 = vadd.f32 0.0, %v1927
      %v1929 = vpop.f32.mrf.mxu0
      %v1930 = vadd.f32 0.0, %v1929
      %1931 = vmatmul.bf16.gmra.mxu0 %v1910
      %v1932 = vpop.f32.mrf.mxu0
      %v1933 = vadd.f32 0.0, %v1932
      %v1934 = vpop.f32.mrf.mxu0
      %v1935 = vadd.f32 0.0, %v1934
      %1936 = vmatmul.bf16.gmra.mxu0 %v1913
      %v1937 = vpop.f32.mrf.mxu0
      %v1938 = vadd.f32 0.0, %v1937
      %v1939 = vpop.f32.mrf.mxu0
      %v1940 = vadd.f32 0.0, %v1939
      %1941 = vmatmul.bf16.gmra.mxu0 %v1916
      %v1942 = vpop.f32.mrf.mxu0
      %v1943 = vadd.f32 0.0, %v1942
      %v1944 = vpop.f32.mrf.mxu0
      %v1945 = vadd.f32 0.0, %v1944
      %1946 = vdwg.mxu0
      %v1947 = vadd.f32 %v1870, %v1928
      %v1948 = vadd.f32 %v1871, %v1930
      %v1949 = vadd.f32 %v1872, %v1933
      %v1950 = vadd.f32 %v1873, %v1935
      %v1951 = vadd.f32 %v1874, %v1938
      %v1952 = vadd.f32 %v1875, %v1940
      %v1953 = vadd.f32 %v1876, %v1943
      %v1954 = vadd.f32 %v1877, %v1945
      %v1955 = vmax.f32 %v1947, 0.0
      %v1956 = vmax.f32 %v1948, 0.0
      %v1957 = vmax.f32 %v1949, 0.0
      %v1958 = vmax.f32 %v1950, 0.0
      %v1959 = vmax.f32 %v1951, 0.0
      %v1960 = vmax.f32 %v1952, 0.0
      %v1961 = vmax.f32 %v1953, 0.0
      %v1962 = vmax.f32 %v1954, 0.0
      %s1963 = scalar_lea.vmem %s262, 128
      %1964 = vst.msk [vmem:[%s1963] sm:$0xff] %vm1461, %v1955
      %1965 = vst.msk [vmem:[%s1963 + $0x8] sm:$0xff] %vm1461, %v1956
      %1966 = vst.msk [vmem:[%s1963 + $0x10] sm:$0xff] %vm1461, %v1957
      %1967 = vst.msk [vmem:[%s1963 + $0x18] sm:$0xff] %vm1461, %v1958
      %1968 = vst.msk [vmem:[%s1963 + $0x20] sm:$0xff] %vm1461, %v1959
      %1969 = vst.msk [vmem:[%s1963 + $0x28] sm:$0xff] %vm1461, %v1960
      %1970 = vst.msk [vmem:[%s1963 + $0x30] sm:$0xff] %vm1461, %v1961
      %1971 = vst.msk [vmem:[%s1963 + $0x38] sm:$0xff] %vm1461, %v1962
      %v1972 = vld [vmem:[%s1008] sm:$0xf]
      %v1973 = vld [vmem:[%s1008 + $0x4] sm:$0xf]
      %v1974 = vld [vmem:[%s1008 + $0x8] sm:$0xf]
      %v1975 = vld [vmem:[%s1008 + $0xc] sm:$0xf]
      %v1976 = vld [vmem:[%s1008 + $0x10] sm:$0xf]
      %v1977 = vld [vmem:[%s1008 + $0x14] sm:$0xf]
      %v1978 = vld [vmem:[%s1008 + $0x18] sm:$0xf]
      %v1979 = vld [vmem:[%s1008 + $0x1c] sm:$0xf]
      %v1988 = vunpack.c.l.b16 %v1972
      %v1989 = vunpack.c.l.b16 %v1973
      %v1990 = vunpack.c.l.b16 %v1974
      %v1991 = vunpack.c.l.b16 %v1975
      %v1992 = vunpack.c.l.b16 %v1976
      %v1993 = vunpack.c.l.b16 %v1977
      %v1994 = vunpack.c.l.b16 %v1978
      %v1995 = vunpack.c.l.b16 %v1979
      %v1996 = vpack.c.b16 %v1989, %v1988
      %v1997 = vpack.c.b16 %v1991, %v1990
      %v1998 = vpack.c.b16 %v1993, %v1992
      %v1999 = vpack.c.b16 %v1995, %v1994
      %v2001 = vsel %vm1317, %v1996, 0
      %v2004 = vsel %vm1317, %v1997, 0
      %v2007 = vsel %vm1317, %v1998, 0
      %v2010 = vsel %vm1317, %v1999, 0
      %2012 = vmatpush.bf16.msra.mxu0 0
      %2013 = vmatpush.bf16.msra.mxu0 0
      %2014 = vmatpush.bf16.msra.mxu0 0
      %2015 = vmatpush.bf16.msra.mxu0 0
      %2016 = vmatpush.bf16.msra.mxu0 0
      %2017 = vmatpush.bf16.msra.mxu0 0
      %2018 = vmatpush.bf16.msra.mxu0 0
      %2019 = vmatpush.bf16.msra.mxu0 %v1502
      %2020 = vmatmul.bf16.gmra.mxu0 %v2001
      %v2021 = vpop.f32.mrf.mxu0
      %v2022 = vadd.f32 0.0, %v2021
      %v2023 = vpop.f32.mrf.mxu0
      %v2024 = vadd.f32 0.0, %v2023
      %2025 = vmatmul.bf16.gmra.mxu0 %v2004
      %v2026 = vpop.f32.mrf.mxu0
      %v2027 = vadd.f32 0.0, %v2026
      %v2028 = vpop.f32.mrf.mxu0
      %v2029 = vadd.f32 0.0, %v2028
      %2030 = vmatmul.bf16.gmra.mxu0 %v2007
      %v2031 = vpop.f32.mrf.mxu0
      %v2032 = vadd.f32 0.0, %v2031
      %v2033 = vpop.f32.mrf.mxu0
      %v2034 = vadd.f32 0.0, %v2033
      %2035 = vmatmul.bf16.gmra.mxu0 %v2010
      %v2036 = vpop.f32.mrf.mxu0
      %v2037 = vadd.f32 0.0, %v2036
      %v2038 = vpop.f32.mrf.mxu0
      %v2039 = vadd.f32 0.0, %v2038
      %2040 = vdwg.mxu0
      %v2041 = vadd.f32 %v1360, %v2022
      %v2042 = vadd.f32 %v1360, %v2024
      %v2043 = vadd.f32 %v1360, %v2027
      %v2044 = vadd.f32 %v1360, %v2029
      %v2045 = vadd.f32 %v1360, %v2032
      %v2046 = vadd.f32 %v1360, %v2034
      %v2047 = vadd.f32 %v1360, %v2037
      %v2048 = vadd.f32 %v1360, %v2039
      %v2049 = vld [vmem:[%s1274] sm:$0xf]
      %v2050 = vld [vmem:[%s1274 + $0x4] sm:$0xf]
      %v2051 = vld [vmem:[%s1274 + $0x8] sm:$0xf]
      %v2052 = vld [vmem:[%s1274 + $0xc] sm:$0xf]
      %v2053 = vld [vmem:[%s1274 + $0x10] sm:$0xf]
      %v2054 = vld [vmem:[%s1274 + $0x14] sm:$0xf]
      %v2055 = vld [vmem:[%s1274 + $0x18] sm:$0xf]
      %v2056 = vld [vmem:[%s1274 + $0x1c] sm:$0xf]
      %v2065 = vunpack.c.l.b16 %v2049
      %v2066 = vunpack.c.l.b16 %v2050
      %v2067 = vunpack.c.l.b16 %v2051
      %v2068 = vunpack.c.l.b16 %v2052
      %v2069 = vunpack.c.l.b16 %v2053
      %v2070 = vunpack.c.l.b16 %v2054
      %v2071 = vunpack.c.l.b16 %v2055
      %v2072 = vunpack.c.l.b16 %v2056
      %v2073 = vpack.c.b16 %v2066, %v2065
      %v2074 = vpack.c.b16 %v2068, %v2067
      %v2075 = vpack.c.b16 %v2070, %v2069
      %v2076 = vpack.c.b16 %v2072, %v2071
      %v2078 = vsel %vm1317, %v2073, 0
      %v2081 = vsel %vm1317, %v2074, 0
      %v2084 = vsel %vm1317, %v2075, 0
      %v2087 = vsel %vm1317, %v2076, 0
      %2089 = vmatpush.bf16.msra.mxu0 0
      %2090 = vmatpush.bf16.msra.mxu0 0
      %2091 = vmatpush.bf16.msra.mxu0 0
      %2092 = vmatpush.bf16.msra.mxu0 0
      %2093 = vmatpush.bf16.msra.mxu0 0
      %2094 = vmatpush.bf16.msra.mxu0 0
      %2095 = vmatpush.bf16.msra.mxu0 0
      %2096 = vmatpush.bf16.msra.mxu0 %v1315
      %2097 = vmatmul.bf16.gmra.mxu0 %v2078
      %v2098 = vpop.f32.mrf.mxu0
      %v2099 = vadd.f32 0.0, %v2098
      %v2100 = vpop.f32.mrf.mxu0
      %v2101 = vadd.f32 0.0, %v2100
      %2102 = vmatmul.bf16.gmra.mxu0 %v2081
      %v2103 = vpop.f32.mrf.mxu0
      %v2104 = vadd.f32 0.0, %v2103
      %v2105 = vpop.f32.mrf.mxu0
      %v2106 = vadd.f32 0.0, %v2105
      %2107 = vmatmul.bf16.gmra.mxu0 %v2084
      %v2108 = vpop.f32.mrf.mxu0
      %v2109 = vadd.f32 0.0, %v2108
      %v2110 = vpop.f32.mrf.mxu0
      %v2111 = vadd.f32 0.0, %v2110
      %2112 = vmatmul.bf16.gmra.mxu0 %v2087
      %v2113 = vpop.f32.mrf.mxu0
      %v2114 = vadd.f32 0.0, %v2113
      %v2115 = vpop.f32.mrf.mxu0
      %v2116 = vadd.f32 0.0, %v2115
      %2117 = vdwg.mxu0
      %v2118 = vadd.f32 %v2041, %v2099
      %v2119 = vadd.f32 %v2042, %v2101
      %v2120 = vadd.f32 %v2043, %v2104
      %v2121 = vadd.f32 %v2044, %v2106
      %v2122 = vadd.f32 %v2045, %v2109
      %v2123 = vadd.f32 %v2046, %v2111
      %v2124 = vadd.f32 %v2047, %v2114
      %v2125 = vadd.f32 %v2048, %v2116
      %v2126 = vmax.f32 %v2118, 0.0
      %v2127 = vmax.f32 %v2119, 0.0
      %v2128 = vmax.f32 %v2120, 0.0
      %v2129 = vmax.f32 %v2121, 0.0
      %v2130 = vmax.f32 %v2122, 0.0
      %v2131 = vmax.f32 %v2123, 0.0
      %v2132 = vmax.f32 %v2124, 0.0
      %v2133 = vmax.f32 %v2125, 0.0
      %s2134 = scalar_lea.vmem %s262, 192
      %2135 = vst.msk [vmem:[%s2134] sm:$0xff] %vm1461, %v2126
      %2136 = vst.msk [vmem:[%s2134 + $0x8] sm:$0xff] %vm1461, %v2127
      %2137 = vst.msk [vmem:[%s2134 + $0x10] sm:$0xff] %vm1461, %v2128
      %2138 = vst.msk [vmem:[%s2134 + $0x18] sm:$0xff] %vm1461, %v2129
      %2139 = vst.msk [vmem:[%s2134 + $0x20] sm:$0xff] %vm1461, %v2130
      %2140 = vst.msk [vmem:[%s2134 + $0x28] sm:$0xff] %vm1461, %v2131
      %2141 = vst.msk [vmem:[%s2134 + $0x30] sm:$0xff] %vm1461, %v2132
      %2142 = vst.msk [vmem:[%s2134 + $0x38] sm:$0xff] %vm1461, %v2133
      %s2143 = smul.u32 8, %s21
      %p2144 = scmp.lt.s32.totalorder %s20, 1
      %s2145 = scalar_select %p2144, %s20, 1
      %p2146 = scmp.lt.s32.totalorder %s2143, 7
      %s2147 = scalar_select %p2146, %s2143, 7
      %s2148 = smul.addr %s2145, 32
      %s2149 = sadd.s32 %s2147, %s2148
      %s2150 = smul.addr %s2149, 8
      %s2151 = scalar_lea.vmem %s5, %s2150
      // Predicated region
      $region41: #{tpu_custom_call.1} parent=39 // pred_check
        %p2152 = pneg %p160
      $region42: #{tpu_custom_call.1} parent=39 // pred_check_branch
        %2154 = sbr.rel (%p2152) target = $region44
      $region43: #{tpu_custom_call.1} parent=39 // pred_region
        %s2155 = smul.u32 8, %s21
      $region44: #{tpu_custom_call.1} parent=39 // pred_fallthru
        _
    $region40: #{tpu_custom_call.1} parent=5 // pred_fallthru
      _
    %p2156 = scmp.le.s32.totalorder 2, %s11
    // Predicated region
    $region45: #{tpu_custom_call.1} parent=5 // pred_check
      %p2157 = pneg %p2156
    $region46: #{tpu_custom_call.1} parent=5 // pred_check_branch
      %2159 = sbr.rel (%p2157) target = $region48
    $region47: #{tpu_custom_call.1} parent=5 // pred_region
      %s2160 = ssub.s32 %s11, 2
      // Predicated region
      $region49: #{tpu_custom_call.1} parent=47 // pred_check
        %p2161 = pneg %p166
      $region50: #{tpu_custom_call.1} parent=47 // pred_check_branch
        %2163 = sbr.rel (%p2161) target = $region52
      $region51: #{tpu_custom_call.1} parent=47 // pred_region
        %s2164 = smul.u32 8, %s23
        %p2165 = scmp.lt.s32.totalorder %s22, 1
        %s2166 = scalar_select %p2165, %s22, 1
        %p2167 = scmp.lt.s32.totalorder %s2164, 7
        %s2168 = scalar_select %p2167, %s2164, 7
        %s2169 = smul.addr %s2166, 32
        %s2170 = sadd.s32 %s2168, %s2169
        %s2171 = smul.addr %s2170, 8
        %s2172 = scalar_lea.vmem %s5, %s2171
      $region52: #{tpu_custom_call.1} parent=47 // pred_fallthru
        _
    $region48: #{tpu_custom_call.1} parent=5 // pred_fallthru
      _
  $region6: #{tpu_custom_call.1} parent=0 // loop_footer
    %s15 = sadd.s32 1, %s11
  $region7: #{tpu_custom_call.1} parent=0 // loop_footer_branch
    %10 = sbr.rel target = $region3
  $region8: #{tpu_custom_call.1} parent=0 // loop_exit
    _

</llo_original>
